<compile_context>
chip_gen: v7x
topology: tpu7x:2x2x1
jax: 0.10.0
libtpu: 0.0.40
codegen_flags: <defaults>
</compile_context>

<pallas_src>
import jax
import jax.numpy as jnp
from jax.experimental import pallas as pl
from jax.experimental.pallas import tpu as pltpu


GATES = ("i", "f", "g", "o")          # PyTorch LSTM gate order


def _ceil_to(n, m):
    return (n + m - 1) // m * m


# ----------------------------------------------------------------------------
# Parameter packing: all MXU weights into one bf16 blob, all bias / vector
# operands into one f32 blob.  Every region starts at an 8-aligned row and at
# lane 0, so in-kernel slices need no relayout.
# ----------------------------------------------------------------------------
def _pack_blob(entries, width, dtype):
    """entries: list of (name, 2-D array).  Returns (blob, {name: (row0,r,c)})."""
    offs = {}
    cur = 0
    for name, a in entries:
        r, c = a.shape
        assert c <= width, (name, a.shape, width)
        offs[name] = (cur, r, c)
        cur += _ceil_to(r, 8)
    blob = jnp.zeros((cur, width), dtype)
    for name, a in entries:
        r0, r, c = offs[name]
        blob = blob.at[r0:r0 + r, 0:c].set(a.astype(dtype))
    return blob, offs


# ----------------------------------------------------------------------------
# Fused kernel: 2-layer LSTM (wavefront-interleaved) + temporal attention +
# after_embeddings + ff layer + final linear.
# ----------------------------------------------------------------------------
def _make_kernel(*, T, B, H, S, E, OUTW, woff, voff):
    f32, bf16 = jnp.float32, jnp.bfloat16

    def kernel(x_ref, tab_ref, hc0_ref, wb_ref, vb_ref, out_ref):
        def w(name):                                   # bf16 MXU operand
            r0, r, c = woff[name]
            return wb_ref[r0:r0 + r, 0:c]

        def v(name):                                   # f32 VPU operand
            r0, r, c = voff[name]
            return vb_ref[r0:r0 + r, 0:c]

        def mm(a, wmat):
            return jnp.dot(a, wmat, preferred_element_type=f32)

        def cell(pre, c):
            # pre: (B, 4H) f32, torch gate order [i | f | g | o].  One fused
            # full-vreg sigmoid on the EUP; the 32-lane gate extractions are
            # XLU work off the MXU path (review option (b): the fused W_hh
            # keeps one MXU weight-push per step instead of four).
            sig = jax.nn.sigmoid(pre)
            g = jnp.tanh(pre[:, 2 * H:3 * H])
            c_new = sig[:, H:2 * H] * c + sig[:, 0:H] * g
            h_new = sig[:, 3 * H:4 * H] * jnp.tanh(c_new)
            return h_new, c_new

        # ---- operands sliced ONCE from the packed blobs (hoisted) ----------
        whh0, wih1, whh1 = w("whh0"), w("wih1"), w("whh1")
        b1 = v("b1")
        att_w = v("att_w")                              # (1, H) f32

        # ---- initial LSTM state (f32 on the element-wise path) -------------
        h0 = hc0_ref[0:B, :]
        h1 = hc0_ref[B:2 * B, :]
        c0 = hc0_ref[2 * B:3 * B, :]
        c1 = hc0_ref[3 * B:4 * B, :]

        # ---- layer-0 input projection for ALL timesteps: one batched MXU
        #      matmul, off the serial recurrence path.
        gx0 = mm(x_ref[...], w("wih0")) + v("b0")       # (T*B, 4H) f32

        # ---- wavefront-interleaved 2-layer recurrence (fully unrolled).
        # Layer-1 step t depends only on layer-0 step t; layer-0 step t+1 is
        # independent of layer-1 step t, so the scheduler overlaps both
        # layers (critical path ~T+1 cell latencies, not 2T+1).
        h0b, h1b = h0.astype(bf16), h1.astype(bf16)
        hs1, scores = [], []
        for t in range(T):
            # layer-0 step t: only h0 @ W_hh0 on the serial chain
            h0, c0 = cell(gx0[t * B:(t + 1) * B, :] + mm(h0b, whh0), c0)
            h0b = h0.astype(bf16)
            # layer-1 step t (inter-layer dropout = identity in eval mode)
            h1, c1 = cell(mm(h0b, wih1) + b1 + mm(h1b, whh1), c1)
            h1b = h1.astype(bf16)
            hs1.append(h1)
            # attention logit for step t (Linear bias dropped: softmax over
            # time is shift-invariant, so it cancels exactly)
            scores.append(jnp.sum(h1 * att_w, axis=1, keepdims=True))

        # ---- softmax over time + context vector (unrolled (B,1)/(B,H) math)
        m = scores[0]
        for t in range(1, T):
            m = jnp.maximum(m, scores[t])
        exps = [jnp.exp(s - m) for s in scores]
        denom = exps[0]
        for t in range(1, T):
            denom = denom + exps[t]
        inv = pl.reciprocal(denom, approx=True)          # EUP slot
        context = (exps[0] * inv) * hs1[0]
        for t in range(1, T):
            context = context + (exps[t] * inv) * hs1[t]  # (B, H) f32
        last = hs1[T - 1]                                 # (B, H) f32

        # ---- tabular path: after_embeddings Linear (output zero-padded to 8
        #      lanes) + ReLU.  embeddings_dropout = identity in eval mode.
        static = tab_ref[0:B, 0:S].astype(bf16)
        cat_emb = tab_ref[B:2 * B, 0:E].astype(bf16)
        cat7 = jnp.maximum(mm(cat_emb, w("ae_w")) + v("ae_b"), 0.0)

        # ---- fflayers[0] over concat([context, last, static, cat7]) via
        #      per-segment weight blocks (no in-kernel concatenation).
        ff = (mm(context.astype(bf16), w("ff_ctx"))
              + mm(last.astype(bf16), w("ff_last"))
              + mm(static, w("ff_sta"))
              + mm(cat7.astype(bf16), w("ff_cat"))
              + v("ff1_b"))                               # (B, H) f32

        # ---- final linear, output columns zero-padded to the slab width so
        #      the store is a single full-lane (lane-dense) write.
        out_ref[0:B, :] = mm(ff.astype(bf16), w("final_w")) + v("final_b")

        # ---- (h_n, c_n) packed lane-dense into one (B, OUTW) row block.
        hc = jnp.concatenate([h0, h1, c0, c1], axis=1)    # (B, 4H)
        if 4 * H < OUTW:
            hc = jnp.concatenate(
                [hc, jnp.zeros((B, OUTW - 4 * H), f32)], axis=1)
        out_ref[B:2 * B, :] = hc

    return kernel


# ----------------------------------------------------------------------------
# Model wrapper
# ----------------------------------------------------------------------------
def drought_net_forward(params, x, hidden, static, cat):
    """x: (B, T, F) batch-first (torch convention); static: (B, S);
    cat: (B, n_cat) int; hidden: (h0, c0) each (n_layers=2, B, H)."""
    B, T, F = x.shape
    h0, c0 = hidden
    n_layers, _, H = h0.shape
    assert n_layers == 2, "fused kernel is specialized to n_layers == 2"
    S = static.shape[1]

    # TODO(synk): embedding-table gathers stay in plain JAX (tiny tables; a
    # Pallas DMA-gather is not worth it at this size).
    embs = [params["emb"][i][cat[:, i]] for i in range(len(params["emb"]))]
    cat_emb = jnp.concatenate(embs, axis=1).astype(jnp.float32)   # (B, E)
    E = cat_emb.shape[1]

    # NOTE: torch nn.LSTM has two biases per layer (b_ih, b_hh); when porting
    # real torch weights, pass b_ih + b_hh here and transpose W_ih / W_hh to
    # [in, out].
    (wih0, whh0, b0), (wih1, whh1, b1) = params["lstm"]
    out_size = params["final_b"].shape[-1]

    AE = _ceil_to(params["ae_w"].shape[1], 8)      # padded after_embeddings out
    OUTW = max(128, _ceil_to(4 * H, 128))          # lane-dense output slab width
    BLOBW = OUTW
    Fp = _ceil_to(F, 8)

    # ---- pack MXU weights (bf16 blob) ----------------------------------
    ae_w = jnp.pad(params["ae_w"],
                   ((0, 0), (0, AE - params["ae_w"].shape[1])))
    ff1_w = params["ff1_w"]                        # (2H + S + 7, H)
    n_cat_rows = ff1_w.shape[0] - 2 * H - S
    w_entries = [
        ("wih0", jnp.pad(wih0, ((0, Fp - F), (0, 0)))),
        ("whh0", whh0),
        ("wih1", wih1),
        ("whh1", whh1),
        ("ae_w", ae_w),
        ("ff_ctx", ff1_w[0:H]),
        ("ff_last", ff1_w[H:2 * H]),
        ("ff_sta", ff1_w[2 * H:2 * H + S]),
        ("ff_cat", jnp.pad(ff1_w[2 * H + S:], ((0, AE - n_cat_rows), (0, 0)))),
        ("final_w", jnp.pad(params["final_w"],
                            ((0, 0), (0, OUTW - out_size)))),
    ]
    wb, woff = _pack_blob(w_entries, BLOBW, jnp.bfloat16)

    # ---- pack biases / vectors (f32 blob) -------------------------------
    v_entries = [
        ("b0", b0.reshape(1, 4 * H)),
        ("b1", b1.reshape(1, 4 * H)),
        ("ae_b", jnp.pad(params["ae_b"].reshape(1, -1),
                         ((0, 0), (0, AE - params["ae_b"].size)))),
        ("ff1_b", params["ff1_b"].reshape(1, H)),
        ("final_b", jnp.pad(params["final_b"].reshape(1, -1),
                            ((0, 0), (0, OUTW - out_size)))),
        ("att_w", params["att_w"].reshape(1, H)),
    ]
    vb, voff = _pack_blob(v_entries, BLOBW, jnp.float32)

    # ---- pack activations ------------------------------------------------
    # time-major, flattened, zero-padded feature dim, bf16 for the MXU
    x_flat = jnp.transpose(x.astype(jnp.float32), (1, 0, 2)).reshape(T * B, F)
    x_pad = jnp.pad(x_flat, ((0, 0), (0, Fp - F))).astype(jnp.bfloat16)

    TABW = _ceil_to(max(S, E), 8)
    tab = jnp.zeros((2 * B, TABW), jnp.float32)
    tab = tab.at[0:B, 0:S].set(static.astype(jnp.float32))
    tab = tab.at[B:2 * B, 0:E].set(cat_emb)

    hc0 = jnp.concatenate(
        [h0.reshape(2 * B, H), c0.reshape(2 * B, H)], axis=0
    ).astype(jnp.float32)                                   # (4B, H)

    kernel = _make_kernel(T=T, B=B, H=H, S=S, E=E, OUTW=OUTW,
                          woff=woff, voff=voff)

    # TODO(synk): for large-batch serving on v7x, add a batch-tiled grid axis
    # with dimension_semantics=("parallel",) so both TensorCores are used.
    slab = pl.pallas_call(
        kernel,
        out_shape=jax.ShapeDtypeStruct((2 * B, OUTW), jnp.float32),
        in_specs=[pl.BlockSpec(memory_space=pltpu.MemorySpace.VMEM)] * 5,
        out_specs=pl.BlockSpec(memory_space=pltpu.MemorySpace.VMEM),
    )(x_pad, tab, hc0, wb, vb)

    out = slab[0:B, 0:out_size]                       # out.view(B, -1) is id.
    h_n = jnp.stack([slab[B:2 * B, 0:H], slab[B:2 * B, H:2 * H]])
    c_n = jnp.stack([slab[B:2 * B, 2 * H:3 * H], slab[B:2 * B, 3 * H:4 * H]])
    return out, (h_n, c_n)


# ----------------------------------------------------------------------------
# Deterministic parameter init (synthetic; mirrors DroughtNet.__init__ shapes;
# all 2-D weights stored pre-transposed [in, out] relative to torch).
# ----------------------------------------------------------------------------
def init_params(key, *, num_input_features, hidden_dim, n_layers, static_dim,
                list_unic_cat, embedding_dims, output_size):
    keys = jax.random.split(key, 32)
    it = iter(keys)

    def rnd(shape, scale=0.1):
        return (scale * jax.random.normal(next(it), shape)).astype(jnp.float32)

    H = hidden_dim
    params = {}
    params["emb"] = [rnd((n, d)) for n, d in zip(list_unic_cat, embedding_dims)]
    E = sum(embedding_dims)
    params["ae_w"] = rnd((E, 7))
    params["ae_b"] = rnd((7,))

    lstm = []
    in_dim = num_input_features
    for _ in range(n_layers):
        lstm.append((rnd((in_dim, 4 * H)), rnd((H, 4 * H)), rnd((4 * H,))))
        in_dim = H
    params["lstm"] = lstm

    params["att_w"] = rnd((1, H))        # nn.Linear(H, 1).weight
    params["att_b"] = rnd((1, 1))

    ff_in = 2 * H + static_dim + 7       # ffnn_layers=2 -> one hidden linear
    params["ff1_w"] = rnd((ff_in, H))
    params["ff1_b"] = rnd((H,))
    params["final_w"] = rnd((H, output_size))
    params["final_b"] = rnd((output_size,))
    return params


# ----------------------------------------------------------------------------
# Pure-JAX reference (full f32, same math) for a correctness sanity check.
# ----------------------------------------------------------------------------
def reference_forward(params, x, hidden, static, cat):
    h0, c0 = hidden
    H = h0.shape[-1]
    embs = [params["emb"][i][cat[:, i]] for i in range(len(params["emb"]))]
    cat_emb = jnp.concatenate(embs, axis=1)
    cat7 = jax.nn.relu(cat_emb @ params["ae_w"] + params["ae_b"])

    seq = x.astype(jnp.float32)
    hs, cs = [], []
    for l, (wih, whh, b) in enumerate(params["lstm"]):
        def step(carry, x_t, wih=wih, whh=whh, b=b):
            h, c = carry
            g = x_t @ wih + h @ whh + b
            i = jax.nn.sigmoid(g[:, :H])
            f = jax.nn.sigmoid(g[:, H:2 * H])
            gg = jnp.tanh(g[:, 2 * H:3 * H])
            o = jax.nn.sigmoid(g[:, 3 * H:])
            c = f * c + i * gg
            h = o * jnp.tanh(c)
            return (h, c), h

        (hn, cn), outs = jax.lax.scan(step, (h0[l], c0[l]),
                                      jnp.transpose(seq, (1, 0, 2)))
        seq = jnp.transpose(outs, (1, 0, 2))
        hs.append(hn)
        cs.append(cn)

    lstm_out = seq                                    # (B, T, H)
    last = lstm_out[:, -1, :]
    scores = lstm_out @ params["att_w"].T + params["att_b"][0, 0]
    attn = jax.nn.softmax(scores, axis=1)
    context = jnp.sum(attn * lstm_out, axis=1)
    feat = jnp.concatenate(
        [context, last, static.astype(jnp.float32), cat7], axis=1)
    out = feat @ params["ff1_w"] + params["ff1_b"]
    out = out @ params["final_w"] + params["final_b"]
    return out, (jnp.stack(hs), jnp.stack(cs))


if __name__ == "__main__":
    # small shapes consistent with the module's forward
    B, T = 8, 8
    num_input_features = 21
    hidden_dim = 32
    n_layers = 2
    static_dim = 10
    list_unic_cat = [5, 7, 11]
    embedding_dims = [3, 4, 5]
    output_size = 6

    key = jax.random.PRNGKey(0)
    kp, kx, ks, kc = jax.random.split(key, 4)
    params = init_params(
        kp, num_input_features=num_input_features, hidden_dim=hidden_dim,
        n_layers=n_layers, static_dim=static_dim, list_unic_cat=list_unic_cat,
        embedding_dims=embedding_dims, output_size=output_size)

    x = jax.random.normal(kx, (B, T, num_input_features), jnp.float32)
    static = jax.random.normal(ks, (B, static_dim), jnp.float32)
    cat = jnp.stack(
        [jax.random.randint(jax.random.fold_in(kc, i), (B,), 0, n)
         for i, n in enumerate(list_unic_cat)], axis=1)          # (B, n_cat)
    h0 = jnp.zeros((n_layers, B, hidden_dim), jnp.float32)
    c0 = jnp.zeros((n_layers, B, hidden_dim), jnp.float32)

    out, (h_n, c_n) = drought_net_forward(params, x, (h0, c0), static, cat)
    jax.block_until_ready((out, h_n, c_n))

    ref_out, (ref_h, ref_c) = reference_forward(params, x, (h0, c0), static, cat)
    assert out.shape == (B, output_size)
    assert h_n.shape == (n_layers, B, hidden_dim)
    assert c_n.shape == (n_layers, B, hidden_dim)
    # bf16 MXU operands in the kernel -> validate vs the full-f32 reference
    # at a slightly relaxed tolerance.
    assert jnp.allclose(out, ref_out, rtol=2e-2, atol=2e-2), (
        float(jnp.max(jnp.abs(out - ref_out))))
    assert jnp.allclose(h_n, ref_h, rtol=2e-2, atol=2e-2)
    assert jnp.allclose(c_n, ref_c, rtol=2e-2, atol=2e-2)

    print("KERNEL_OK")
</pallas_src>

<mosaic_0001>
module attributes {stable_mosaic.version = 11 : i64} {
  func.func @kernel(%arg0: memref<64x24xbf16, #tpu.memory_space<vmem>>, %arg1: memref<16x16xf32, #tpu.memory_space<vmem>>, %arg2: memref<32x32xf32, #tpu.memory_space<vmem>>, %arg3: memref<256x128xbf16, #tpu.memory_space<vmem>>, %arg4: memref<48x128xf32, #tpu.memory_space<vmem>>, %arg5: memref<16x128xf32, #tpu.memory_space<vmem>>) attributes {dimension_semantics = [], scalar_prefetch = 0 : i64, scratch_operands = 0 : i64, tpu.core_type = #tpu.core_type<tc>} {
    %c24 = arith.constant 24 : index
    %c0 = arith.constant 0 : index
    %0 = vector.load %arg3[%c24, %c0] : memref<256x128xbf16, #tpu.memory_space<vmem>>, vector<32x128xbf16>
    %c56 = arith.constant 56 : index
    %c0_0 = arith.constant 0 : index
    %1 = vector.load %arg3[%c56, %c0_0] : memref<256x128xbf16, #tpu.memory_space<vmem>>, vector<32x128xbf16>
    %c88 = arith.constant 88 : index
    %c0_1 = arith.constant 0 : index
    %2 = vector.load %arg3[%c88, %c0_1] : memref<256x128xbf16, #tpu.memory_space<vmem>>, vector<32x128xbf16>
    %c8 = arith.constant 8 : index
    %c0_2 = arith.constant 0 : index
    %3 = vector.load %arg4[%c8, %c0_2] : memref<48x128xf32, #tpu.memory_space<vmem>>, vector<1x128xf32>
    %c40 = arith.constant 40 : index
    %c0_3 = arith.constant 0 : index
    %4 = vector.load %arg4[%c40, %c0_3] : memref<48x128xf32, #tpu.memory_space<vmem>>, vector<1x32xf32>
    %c0_4 = arith.constant 0 : index
    %c0_5 = arith.constant 0 : index
    %5 = vector.load %arg2[%c0_4, %c0_5] : memref<32x32xf32, #tpu.memory_space<vmem>>, vector<8x32xf32>
    %c8_6 = arith.constant 8 : index
    %c0_7 = arith.constant 0 : index
    %6 = vector.load %arg2[%c8_6, %c0_7] : memref<32x32xf32, #tpu.memory_space<vmem>>, vector<8x32xf32>
    %c16 = arith.constant 16 : index
    %c0_8 = arith.constant 0 : index
    %7 = vector.load %arg2[%c16, %c0_8] : memref<32x32xf32, #tpu.memory_space<vmem>>, vector<8x32xf32>
    %c24_9 = arith.constant 24 : index
    %c0_10 = arith.constant 0 : index
    %8 = vector.load %arg2[%c24_9, %c0_10] : memref<32x32xf32, #tpu.memory_space<vmem>>, vector<8x32xf32>
    %c0_11 = arith.constant 0 : index
    %c0_12 = arith.constant 0 : index
    %9 = vector.load %arg0[%c0_11, %c0_12] : memref<64x24xbf16, #tpu.memory_space<vmem>>, vector<64x24xbf16>
    %c0_13 = arith.constant 0 : index
    %c0_14 = arith.constant 0 : index
    %10 = vector.load %arg3[%c0_13, %c0_14] : memref<256x128xbf16, #tpu.memory_space<vmem>>, vector<24x128xbf16>
    %cst = arith.constant dense<0.000000e+00> : vector<64x128xf32>
    %11 = tpu.matmul %9, %10, %cst {dimension_numbers = #tpu.dot_dimension_numbers<[1], [0], [0], [1], [0, 0, 1, 1], [], []>} : vector<64x24xbf16>, vector<24x128xbf16>, vector<64x128xf32> -> vector<64x128xf32>
    %c0_15 = arith.constant 0 : index
    %c0_16 = arith.constant 0 : index
    %12 = vector.load %arg4[%c0_15, %c0_16] : memref<48x128xf32, #tpu.memory_space<vmem>>, vector<1x128xf32>
    %13 = vector.broadcast %12 : vector<1x128xf32> to vector<64x128xf32>
    %14 = arith.addf %11, %13 : vector<64x128xf32>
    %15 = arith.truncf %5 : vector<8x32xf32> to vector<8x32xbf16>
    %16 = arith.truncf %6 : vector<8x32xf32> to vector<8x32xbf16>
    %17 = vector.extract_strided_slice %14 {offsets = [0, 0], sizes = [8, 128], strides = [1, 1]} : vector<64x128xf32> to vector<8x128xf32>
    %cst_17 = arith.constant dense<0.000000e+00> : vector<8x128xf32>
    %18 = tpu.matmul %15, %0, %cst_17 {dimension_numbers = #tpu.dot_dimension_numbers<[1], [0], [0], [1], [0, 0, 1, 1], [], []>} : vector<8x32xbf16>, vector<32x128xbf16>, vector<8x128xf32> -> vector<8x128xf32>
    %19 = arith.addf %17, %18 : vector<8x128xf32>
    %20 = arith.negf %19 : vector<8x128xf32>
    %21 = math.exp %20 : vector<8x128xf32>
    %cst_18 = arith.constant 1.000000e+00 : f32
    %22 = vector.broadcast %cst_18 : f32 to vector<8x128xf32>
    %23 = arith.addf %22, %21 : vector<8x128xf32>
    %24 = arith.divf %22, %23 : vector<8x128xf32>
    %25 = vector.extract_strided_slice %19 {offsets = [0, 64], sizes = [8, 32], strides = [1, 1]} : vector<8x128xf32> to vector<8x32xf32>
    %26 = math.tanh %25 : vector<8x32xf32>
    %27 = vector.extract_strided_slice %24 {offsets = [0, 32], sizes = [8, 32], strides = [1, 1]} : vector<8x128xf32> to vector<8x32xf32>
    %28 = arith.mulf %27, %7 : vector<8x32xf32>
    %29 = vector.extract_strided_slice %24 {offsets = [0, 0], sizes = [8, 32], strides = [1, 1]} : vector<8x128xf32> to vector<8x32xf32>
    %30 = arith.mulf %29, %26 : vector<8x32xf32>
    %31 = arith.addf %28, %30 : vector<8x32xf32>
    %32 = vector.extract_strided_slice %24 {offsets = [0, 96], sizes = [8, 32], strides = [1, 1]} : vector<8x128xf32> to vector<8x32xf32>
    %33 = math.tanh %31 : vector<8x32xf32>
    %34 = arith.mulf %32, %33 : vector<8x32xf32>
    %35 = arith.truncf %34 : vector<8x32xf32> to vector<8x32xbf16>
    %cst_19 = arith.constant dense<0.000000e+00> : vector<8x128xf32>
    %36 = tpu.matmul %35, %1, %cst_19 {dimension_numbers = #tpu.dot_dimension_numbers<[1], [0], [0], [1], [0, 0, 1, 1], [], []>} : vector<8x32xbf16>, vector<32x128xbf16>, vector<8x128xf32> -> vector<8x128xf32>
    %37 = vector.broadcast %3 : vector<1x128xf32> to vector<8x128xf32>
    %38 = arith.addf %36, %37 : vector<8x128xf32>
    %cst_20 = arith.constant dense<0.000000e+00> : vector<8x128xf32>
    %39 = tpu.matmul %16, %2, %cst_20 {dimension_numbers = #tpu.dot_dimension_numbers<[1], [0], [0], [1], [0, 0, 1, 1], [], []>} : vector<8x32xbf16>, vector<32x128xbf16>, vector<8x128xf32> -> vector<8x128xf32>
    %40 = arith.addf %38, %39 : vector<8x128xf32>
    %41 = arith.negf %40 : vector<8x128xf32>
    %42 = math.exp %41 : vector<8x128xf32>
    %cst_21 = arith.constant 1.000000e+00 : f32
    %43 = vector.broadcast %cst_21 : f32 to vector<8x128xf32>
    %44 = arith.addf %43, %42 : vector<8x128xf32>
    %45 = arith.divf %43, %44 : vector<8x128xf32>
    %46 = vector.extract_strided_slice %40 {offsets = [0, 64], sizes = [8, 32], strides = [1, 1]} : vector<8x128xf32> to vector<8x32xf32>
    %47 = math.tanh %46 : vector<8x32xf32>
    %48 = vector.extract_strided_slice %45 {offsets = [0, 32], sizes = [8, 32], strides = [1, 1]} : vector<8x128xf32> to vector<8x32xf32>
    %49 = arith.mulf %48, %8 : vector<8x32xf32>
    %50 = vector.extract_strided_slice %45 {offsets = [0, 0], sizes = [8, 32], strides = [1, 1]} : vector<8x128xf32> to vector<8x32xf32>
    %51 = arith.mulf %50, %47 : vector<8x32xf32>
    %52 = arith.addf %49, %51 : vector<8x32xf32>
    %53 = vector.extract_strided_slice %45 {offsets = [0, 96], sizes = [8, 32], strides = [1, 1]} : vector<8x128xf32> to vector<8x32xf32>
    %54 = math.tanh %52 : vector<8x32xf32>
    %55 = arith.mulf %53, %54 : vector<8x32xf32>
    %56 = arith.truncf %55 : vector<8x32xf32> to vector<8x32xbf16>
    %57 = vector.broadcast %4 : vector<1x32xf32> to vector<8x32xf32>
    %58 = arith.mulf %55, %57 : vector<8x32xf32>
    %cst_22 = arith.constant dense<0.000000e+00> : vector<8xf32>
    %59 = vector.multi_reduction <add>, %58, %cst_22 [1] : vector<8x32xf32> to vector<8xf32>
    %60 = vector.shape_cast %59 : vector<8xf32> to vector<8x1xf32>
    %61 = vector.extract_strided_slice %14 {offsets = [8, 0], sizes = [8, 128], strides = [1, 1]} : vector<64x128xf32> to vector<8x128xf32>
    %cst_23 = arith.constant dense<0.000000e+00> : vector<8x128xf32>
    %62 = tpu.matmul %35, %0, %cst_23 {dimension_numbers = #tpu.dot_dimension_numbers<[1], [0], [0], [1], [0, 0, 1, 1], [], []>} : vector<8x32xbf16>, vector<32x128xbf16>, vector<8x128xf32> -> vector<8x128xf32>
    %63 = arith.addf %61, %62 : vector<8x128xf32>
    %64 = arith.negf %63 : vector<8x128xf32>
    %65 = math.exp %64 : vector<8x128xf32>
    %cst_24 = arith.constant 1.000000e+00 : f32
    %66 = vector.broadcast %cst_24 : f32 to vector<8x128xf32>
    %67 = arith.addf %66, %65 : vector<8x128xf32>
    %68 = arith.divf %66, %67 : vector<8x128xf32>
    %69 = vector.extract_strided_slice %63 {offsets = [0, 64], sizes = [8, 32], strides = [1, 1]} : vector<8x128xf32> to vector<8x32xf32>
    %70 = math.tanh %69 : vector<8x32xf32>
    %71 = vector.extract_strided_slice %68 {offsets = [0, 32], sizes = [8, 32], strides = [1, 1]} : vector<8x128xf32> to vector<8x32xf32>
    %72 = arith.mulf %71, %31 : vector<8x32xf32>
    %73 = vector.extract_strided_slice %68 {offsets = [0, 0], sizes = [8, 32], strides = [1, 1]} : vector<8x128xf32> to vector<8x32xf32>
    %74 = arith.mulf %73, %70 : vector<8x32xf32>
    %75 = arith.addf %72, %74 : vector<8x32xf32>
    %76 = vector.extract_strided_slice %68 {offsets = [0, 96], sizes = [8, 32], strides = [1, 1]} : vector<8x128xf32> to vector<8x32xf32>
    %77 = math.tanh %75 : vector<8x32xf32>
    %78 = arith.mulf %76, %77 : vector<8x32xf32>
    %79 = arith.truncf %78 : vector<8x32xf32> to vector<8x32xbf16>
    %cst_25 = arith.constant dense<0.000000e+00> : vector<8x128xf32>
    %80 = tpu.matmul %79, %1, %cst_25 {dimension_numbers = #tpu.dot_dimension_numbers<[1], [0], [0], [1], [0, 0, 1, 1], [], []>} : vector<8x32xbf16>, vector<32x128xbf16>, vector<8x128xf32> -> vector<8x128xf32>
    %81 = vector.broadcast %3 : vector<1x128xf32> to vector<8x128xf32>
    %82 = arith.addf %80, %81 : vector<8x128xf32>
    %cst_26 = arith.constant dense<0.000000e+00> : vector<8x128xf32>
    %83 = tpu.matmul %56, %2, %cst_26 {dimension_numbers = #tpu.dot_dimension_numbers<[1], [0], [0], [1], [0, 0, 1, 1], [], []>} : vector<8x32xbf16>, vector<32x128xbf16>, vector<8x128xf32> -> vector<8x128xf32>
    %84 = arith.addf %82, %83 : vector<8x128xf32>
    %85 = arith.negf %84 : vector<8x128xf32>
    %86 = math.exp %85 : vector<8x128xf32>
    %cst_27 = arith.constant 1.000000e+00 : f32
    %87 = vector.broadcast %cst_27 : f32 to vector<8x128xf32>
    %88 = arith.addf %87, %86 : vector<8x128xf32>
    %89 = arith.divf %87, %88 : vector<8x128xf32>
    %90 = vector.extract_strided_slice %84 {offsets = [0, 64], sizes = [8, 32], strides = [1, 1]} : vector<8x128xf32> to vector<8x32xf32>
    %91 = math.tanh %90 : vector<8x32xf32>
    %92 = vector.extract_strided_slice %89 {offsets = [0, 32], sizes = [8, 32], strides = [1, 1]} : vector<8x128xf32> to vector<8x32xf32>
    %93 = arith.mulf %92, %52 : vector<8x32xf32>
    %94 = vector.extract_strided_slice %89 {offsets = [0, 0], sizes = [8, 32], strides = [1, 1]} : vector<8x128xf32> to vector<8x32xf32>
    %95 = arith.mulf %94, %91 : vector<8x32xf32>
    %96 = arith.addf %93, %95 : vector<8x32xf32>
    %97 = vector.extract_strided_slice %89 {offsets = [0, 96], sizes = [8, 32], strides = [1, 1]} : vector<8x128xf32> to vector<8x32xf32>
    %98 = math.tanh %96 : vector<8x32xf32>
    %99 = arith.mulf %97, %98 : vector<8x32xf32>
    %100 = arith.truncf %99 : vector<8x32xf32> to vector<8x32xbf16>
    %101 = vector.broadcast %4 : vector<1x32xf32> to vector<8x32xf32>
    %102 = arith.mulf %99, %101 : vector<8x32xf32>
    %cst_28 = arith.constant dense<0.000000e+00> : vector<8xf32>
    %103 = vector.multi_reduction <add>, %102, %cst_28 [1] : vector<8x32xf32> to vector<8xf32>
    %104 = vector.shape_cast %103 : vector<8xf32> to vector<8x1xf32>
    %105 = vector.extract_strided_slice %14 {offsets = [16, 0], sizes = [8, 128], strides = [1, 1]} : vector<64x128xf32> to vector<8x128xf32>
    %cst_29 = arith.constant dense<0.000000e+00> : vector<8x128xf32>
    %106 = tpu.matmul %79, %0, %cst_29 {dimension_numbers = #tpu.dot_dimension_numbers<[1], [0], [0], [1], [0, 0, 1, 1], [], []>} : vector<8x32xbf16>, vector<32x128xbf16>, vector<8x128xf32> -> vector<8x128xf32>
    %107 = arith.addf %105, %106 : vector<8x128xf32>
    %108 = arith.negf %107 : vector<8x128xf32>
    %109 = math.exp %108 : vector<8x128xf32>
    %cst_30 = arith.constant 1.000000e+00 : f32
    %110 = vector.broadcast %cst_30 : f32 to vector<8x128xf32>
    %111 = arith.addf %110, %109 : vector<8x128xf32>
    %112 = arith.divf %110, %111 : vector<8x128xf32>
    %113 = vector.extract_strided_slice %107 {offsets = [0, 64], sizes = [8, 32], strides = [1, 1]} : vector<8x128xf32> to vector<8x32xf32>
    %114 = math.tanh %113 : vector<8x32xf32>
    %115 = vector.extract_strided_slice %112 {offsets = [0, 32], sizes = [8, 32], strides = [1, 1]} : vector<8x128xf32> to vector<8x32xf32>
    %116 = arith.mulf %115, %75 : vector<8x32xf32>
    %117 = vector.extract_strided_slice %112 {offsets = [0, 0], sizes = [8, 32], strides = [1, 1]} : vector<8x128xf32> to vector<8x32xf32>
    %118 = arith.mulf %117, %114 : vector<8x32xf32>
    %119 = arith.addf %116, %118 : vector<8x32xf32>
    %120 = vector.extract_strided_slice %112 {offsets = [0, 96], sizes = [8, 32], strides = [1, 1]} : vector<8x128xf32> to vector<8x32xf32>
    %121 = math.tanh %119 : vector<8x32xf32>
    %122 = arith.mulf %120, %121 : vector<8x32xf32>
    %123 = arith.truncf %122 : vector<8x32xf32> to vector<8x32xbf16>
    %cst_31 = arith.constant dense<0.000000e+00> : vector<8x128xf32>
    %124 = tpu.matmul %123, %1, %cst_31 {dimension_numbers = #tpu.dot_dimension_numbers<[1], [0], [0], [1], [0, 0, 1, 1], [], []>} : vector<8x32xbf16>, vector<32x128xbf16>, vector<8x128xf32> -> vector<8x128xf32>
    %125 = vector.broadcast %3 : vector<1x128xf32> to vector<8x128xf32>
    %126 = arith.addf %124, %125 : vector<8x128xf32>
    %cst_32 = arith.constant dense<0.000000e+00> : vector<8x128xf32>
    %127 = tpu.matmul %100, %2, %cst_32 {dimension_numbers = #tpu.dot_dimension_numbers<[1], [0], [0], [1], [0, 0, 1, 1], [], []>} : vector<8x32xbf16>, vector<32x128xbf16>, vector<8x128xf32> -> vector<8x128xf32>
    %128 = arith.addf %126, %127 : vector<8x128xf32>
    %129 = arith.negf %128 : vector<8x128xf32>
    %130 = math.exp %129 : vector<8x128xf32>
    %cst_33 = arith.constant 1.000000e+00 : f32
    %131 = vector.broadcast %cst_33 : f32 to vector<8x128xf32>
    %132 = arith.addf %131, %130 : vector<8x128xf32>
    %133 = arith.divf %131, %132 : vector<8x128xf32>
    %134 = vector.extract_strided_slice %128 {offsets = [0, 64], sizes = [8, 32], strides = [1, 1]} : vector<8x128xf32> to vector<8x32xf32>
    %135 = math.tanh %134 : vector<8x32xf32>
    %136 = vector.extract_strided_slice %133 {offsets = [0, 32], sizes = [8, 32], strides = [1, 1]} : vector<8x128xf32> to vector<8x32xf32>
    %137 = arith.mulf %136, %96 : vector<8x32xf32>
    %138 = vector.extract_strided_slice %133 {offsets = [0, 0], sizes = [8, 32], strides = [1, 1]} : vector<8x128xf32> to vector<8x32xf32>
    %139 = arith.mulf %138, %135 : vector<8x32xf32>
    %140 = arith.addf %137, %139 : vector<8x32xf32>
    %141 = vector.extract_strided_slice %133 {offsets = [0, 96], sizes = [8, 32], strides = [1, 1]} : vector<8x128xf32> to vector<8x32xf32>
    %142 = math.tanh %140 : vector<8x32xf32>
    %143 = arith.mulf %141, %142 : vector<8x32xf32>
    %144 = arith.truncf %143 : vector<8x32xf32> to vector<8x32xbf16>
    %145 = vector.broadcast %4 : vector<1x32xf32> to vector<8x32xf32>
    %146 = arith.mulf %143, %145 : vector<8x32xf32>
    %cst_34 = arith.constant dense<0.000000e+00> : vector<8xf32>
    %147 = vector.multi_reduction <add>, %146, %cst_34 [1] : vector<8x32xf32> to vector<8xf32>
    %148 = vector.shape_cast %147 : vector<8xf32> to vector<8x1xf32>
    %149 = vector.extract_strided_slice %14 {offsets = [24, 0], sizes = [8, 128], strides = [1, 1]} : vector<64x128xf32> to vector<8x128xf32>
    %cst_35 = arith.constant dense<0.000000e+00> : vector<8x128xf32>
    %150 = tpu.matmul %123, %0, %cst_35 {dimension_numbers = #tpu.dot_dimension_numbers<[1], [0], [0], [1], [0, 0, 1, 1], [], []>} : vector<8x32xbf16>, vector<32x128xbf16>, vector<8x128xf32> -> vector<8x128xf32>
    %151 = arith.addf %149, %150 : vector<8x128xf32>
    %152 = arith.negf %151 : vector<8x128xf32>
    %153 = math.exp %152 : vector<8x128xf32>
    %cst_36 = arith.constant 1.000000e+00 : f32
    %154 = vector.broadcast %cst_36 : f32 to vector<8x128xf32>
    %155 = arith.addf %154, %153 : vector<8x128xf32>
    %156 = arith.divf %154, %155 : vector<8x128xf32>
    %157 = vector.extract_strided_slice %151 {offsets = [0, 64], sizes = [8, 32], strides = [1, 1]} : vector<8x128xf32> to vector<8x32xf32>
    %158 = math.tanh %157 : vector<8x32xf32>
    %159 = vector.extract_strided_slice %156 {offsets = [0, 32], sizes = [8, 32], strides = [1, 1]} : vector<8x128xf32> to vector<8x32xf32>
    %160 = arith.mulf %159, %119 : vector<8x32xf32>
    %161 = vector.extract_strided_slice %156 {offsets = [0, 0], sizes = [8, 32], strides = [1, 1]} : vector<8x128xf32> to vector<8x32xf32>
    %162 = arith.mulf %161, %158 : vector<8x32xf32>
    %163 = arith.addf %160, %162 : vector<8x32xf32>
    %164 = vector.extract_strided_slice %156 {offsets = [0, 96], sizes = [8, 32], strides = [1, 1]} : vector<8x128xf32> to vector<8x32xf32>
    %165 = math.tanh %163 : vector<8x32xf32>
    %166 = arith.mulf %164, %165 : vector<8x32xf32>
    %167 = arith.truncf %166 : vector<8x32xf32> to vector<8x32xbf16>
    %cst_37 = arith.constant dense<0.000000e+00> : vector<8x128xf32>
    %168 = tpu.matmul %167, %1, %cst_37 {dimension_numbers = #tpu.dot_dimension_numbers<[1], [0], [0], [1], [0, 0, 1, 1], [], []>} : vector<8x32xbf16>, vector<32x128xbf16>, vector<8x128xf32> -> vector<8x128xf32>
    %169 = vector.broadcast %3 : vector<1x128xf32> to vector<8x128xf32>
    %170 = arith.addf %168, %169 : vector<8x128xf32>
    %cst_38 = arith.constant dense<0.000000e+00> : vector<8x128xf32>
    %171 = tpu.matmul %144, %2, %cst_38 {dimension_numbers = #tpu.dot_dimension_numbers<[1], [0], [0], [1], [0, 0, 1, 1], [], []>} : vector<8x32xbf16>, vector<32x128xbf16>, vector<8x128xf32> -> vector<8x128xf32>
    %172 = arith.addf %170, %171 : vector<8x128xf32>
    %173 = arith.negf %172 : vector<8x128xf32>
    %174 = math.exp %173 : vector<8x128xf32>
    %cst_39 = arith.constant 1.000000e+00 : f32
    %175 = vector.broadcast %cst_39 : f32 to vector<8x128xf32>
    %176 = arith.addf %175, %174 : vector<8x128xf32>
    %177 = arith.divf %175, %176 : vector<8x128xf32>
    %178 = vector.extract_strided_slice %172 {offsets = [0, 64], sizes = [8, 32], strides = [1, 1]} : vector<8x128xf32> to vector<8x32xf32>
    %179 = math.tanh %178 : vector<8x32xf32>
    %180 = vector.extract_strided_slice %177 {offsets = [0, 32], sizes = [8, 32], strides = [1, 1]} : vector<8x128xf32> to vector<8x32xf32>
    %181 = arith.mulf %180, %140 : vector<8x32xf32>
    %182 = vector.extract_strided_slice %177 {offsets = [0, 0], sizes = [8, 32], strides = [1, 1]} : vector<8x128xf32> to vector<8x32xf32>
    %183 = arith.mulf %182, %179 : vector<8x32xf32>
    %184 = arith.addf %181, %183 : vector<8x32xf32>
    %185 = vector.extract_strided_slice %177 {offsets = [0, 96], sizes = [8, 32], strides = [1, 1]} : vector<8x128xf32> to vector<8x32xf32>
    %186 = math.tanh %184 : vector<8x32xf32>
    %187 = arith.mulf %185, %186 : vector<8x32xf32>
    %188 = arith.truncf %187 : vector<8x32xf32> to vector<8x32xbf16>
    %189 = vector.broadcast %4 : vector<1x32xf32> to vector<8x32xf32>
    %190 = arith.mulf %187, %189 : vector<8x32xf32>
    %cst_40 = arith.constant dense<0.000000e+00> : vector<8xf32>
    %191 = vector.multi_reduction <add>, %190, %cst_40 [1] : vector<8x32xf32> to vector<8xf32>
    %192 = vector.shape_cast %191 : vector<8xf32> to vector<8x1xf32>
    %193 = vector.extract_strided_slice %14 {offsets = [32, 0], sizes = [8, 128], strides = [1, 1]} : vector<64x128xf32> to vector<8x128xf32>
    %cst_41 = arith.constant dense<0.000000e+00> : vector<8x128xf32>
    %194 = tpu.matmul %167, %0, %cst_41 {dimension_numbers = #tpu.dot_dimension_numbers<[1], [0], [0], [1], [0, 0, 1, 1], [], []>} : vector<8x32xbf16>, vector<32x128xbf16>, vector<8x128xf32> -> vector<8x128xf32>
    %195 = arith.addf %193, %194 : vector<8x128xf32>
    %196 = arith.negf %195 : vector<8x128xf32>
    %197 = math.exp %196 : vector<8x128xf32>
    %cst_42 = arith.constant 1.000000e+00 : f32
    %198 = vector.broadcast %cst_42 : f32 to vector<8x128xf32>
    %199 = arith.addf %198, %197 : vector<8x128xf32>
    %200 = arith.divf %198, %199 : vector<8x128xf32>
    %201 = vector.extract_strided_slice %195 {offsets = [0, 64], sizes = [8, 32], strides = [1, 1]} : vector<8x128xf32> to vector<8x32xf32>
    %202 = math.tanh %201 : vector<8x32xf32>
    %203 = vector.extract_strided_slice %200 {offsets = [0, 32], sizes = [8, 32], strides = [1, 1]} : vector<8x128xf32> to vector<8x32xf32>
    %204 = arith.mulf %203, %163 : vector<8x32xf32>
    %205 = vector.extract_strided_slice %200 {offsets = [0, 0], sizes = [8, 32], strides = [1, 1]} : vector<8x128xf32> to vector<8x32xf32>
    %206 = arith.mulf %205, %202 : vector<8x32xf32>
    %207 = arith.addf %204, %206 : vector<8x32xf32>
    %208 = vector.extract_strided_slice %200 {offsets = [0, 96], sizes = [8, 32], strides = [1, 1]} : vector<8x128xf32> to vector<8x32xf32>
    %209 = math.tanh %207 : vector<8x32xf32>
    %210 = arith.mulf %208, %209 : vector<8x32xf32>
    %211 = arith.truncf %210 : vector<8x32xf32> to vector<8x32xbf16>
    %cst_43 = arith.constant dense<0.000000e+00> : vector<8x128xf32>
    %212 = tpu.matmul %211, %1, %cst_43 {dimension_numbers = #tpu.dot_dimension_numbers<[1], [0], [0], [1], [0, 0, 1, 1], [], []>} : vector<8x32xbf16>, vector<32x128xbf16>, vector<8x128xf32> -> vector<8x128xf32>
    %213 = vector.broadcast %3 : vector<1x128xf32> to vector<8x128xf32>
    %214 = arith.addf %212, %213 : vector<8x128xf32>
    %cst_44 = arith.constant dense<0.000000e+00> : vector<8x128xf32>
    %215 = tpu.matmul %188, %2, %cst_44 {dimension_numbers = #tpu.dot_dimension_numbers<[1], [0], [0], [1], [0, 0, 1, 1], [], []>} : vector<8x32xbf16>, vector<32x128xbf16>, vector<8x128xf32> -> vector<8x128xf32>
    %216 = arith.addf %214, %215 : vector<8x128xf32>
    %217 = arith.negf %216 : vector<8x128xf32>
    %218 = math.exp %217 : vector<8x128xf32>
    %cst_45 = arith.constant 1.000000e+00 : f32
    %219 = vector.broadcast %cst_45 : f32 to vector<8x128xf32>
    %220 = arith.addf %219, %218 : vector<8x128xf32>
    %221 = arith.divf %219, %220 : vector<8x128xf32>
    %222 = vector.extract_strided_slice %216 {offsets = [0, 64], sizes = [8, 32], strides = [1, 1]} : vector<8x128xf32> to vector<8x32xf32>
    %223 = math.tanh %222 : vector<8x32xf32>
    %224 = vector.extract_strided_slice %221 {offsets = [0, 32], sizes = [8, 32], strides = [1, 1]} : vector<8x128xf32> to vector<8x32xf32>
    %225 = arith.mulf %224, %184 : vector<8x32xf32>
    %226 = vector.extract_strided_slice %221 {offsets = [0, 0], sizes = [8, 32], strides = [1, 1]} : vector<8x128xf32> to vector<8x32xf32>
    %227 = arith.mulf %226, %223 : vector<8x32xf32>
    %228 = arith.addf %225, %227 : vector<8x32xf32>
    %229 = vector.extract_strided_slice %221 {offsets = [0, 96], sizes = [8, 32], strides = [1, 1]} : vector<8x128xf32> to vector<8x32xf32>
    %230 = math.tanh %228 : vector<8x32xf32>
    %231 = arith.mulf %229, %230 : vector<8x32xf32>
    %232 = arith.truncf %231 : vector<8x32xf32> to vector<8x32xbf16>
    %233 = vector.broadcast %4 : vector<1x32xf32> to vector<8x32xf32>
    %234 = arith.mulf %231, %233 : vector<8x32xf32>
    %cst_46 = arith.constant dense<0.000000e+00> : vector<8xf32>
    %235 = vector.multi_reduction <add>, %234, %cst_46 [1] : vector<8x32xf32> to vector<8xf32>
    %236 = vector.shape_cast %235 : vector<8xf32> to vector<8x1xf32>
    %237 = vector.extract_strided_slice %14 {offsets = [40, 0], sizes = [8, 128], strides = [1, 1]} : vector<64x128xf32> to vector<8x128xf32>
    %cst_47 = arith.constant dense<0.000000e+00> : vector<8x128xf32>
    %238 = tpu.matmul %211, %0, %cst_47 {dimension_numbers = #tpu.dot_dimension_numbers<[1], [0], [0], [1], [0, 0, 1, 1], [], []>} : vector<8x32xbf16>, vector<32x128xbf16>, vector<8x128xf32> -> vector<8x128xf32>
    %239 = arith.addf %237, %238 : vector<8x128xf32>
    %240 = arith.negf %239 : vector<8x128xf32>
    %241 = math.exp %240 : vector<8x128xf32>
    %cst_48 = arith.constant 1.000000e+00 : f32
    %242 = vector.broadcast %cst_48 : f32 to vector<8x128xf32>
    %243 = arith.addf %242, %241 : vector<8x128xf32>
    %244 = arith.divf %242, %243 : vector<8x128xf32>
    %245 = vector.extract_strided_slice %239 {offsets = [0, 64], sizes = [8, 32], strides = [1, 1]} : vector<8x128xf32> to vector<8x32xf32>
    %246 = math.tanh %245 : vector<8x32xf32>
    %247 = vector.extract_strided_slice %244 {offsets = [0, 32], sizes = [8, 32], strides = [1, 1]} : vector<8x128xf32> to vector<8x32xf32>
    %248 = arith.mulf %247, %207 : vector<8x32xf32>
    %249 = vector.extract_strided_slice %244 {offsets = [0, 0], sizes = [8, 32], strides = [1, 1]} : vector<8x128xf32> to vector<8x32xf32>
    %250 = arith.mulf %249, %246 : vector<8x32xf32>
    %251 = arith.addf %248, %250 : vector<8x32xf32>
    %252 = vector.extract_strided_slice %244 {offsets = [0, 96], sizes = [8, 32], strides = [1, 1]} : vector<8x128xf32> to vector<8x32xf32>
    %253 = math.tanh %251 : vector<8x32xf32>
    %254 = arith.mulf %252, %253 : vector<8x32xf32>
    %255 = arith.truncf %254 : vector<8x32xf32> to vector<8x32xbf16>
    %cst_49 = arith.constant dense<0.000000e+00> : vector<8x128xf32>
    %256 = tpu.matmul %255, %1, %cst_49 {dimension_numbers = #tpu.dot_dimension_numbers<[1], [0], [0], [1], [0, 0, 1, 1], [], []>} : vector<8x32xbf16>, vector<32x128xbf16>, vector<8x128xf32> -> vector<8x128xf32>
    %257 = vector.broadcast %3 : vector<1x128xf32> to vector<8x128xf32>
    %258 = arith.addf %256, %257 : vector<8x128xf32>
    %cst_50 = arith.constant dense<0.000000e+00> : vector<8x128xf32>
    %259 = tpu.matmul %232, %2, %cst_50 {dimension_numbers = #tpu.dot_dimension_numbers<[1], [0], [0], [1], [0, 0, 1, 1], [], []>} : vector<8x32xbf16>, vector<32x128xbf16>, vector<8x128xf32> -> vector<8x128xf32>
    %260 = arith.addf %258, %259 : vector<8x128xf32>
    %261 = arith.negf %260 : vector<8x128xf32>
    %262 = math.exp %261 : vector<8x128xf32>
    %cst_51 = arith.constant 1.000000e+00 : f32
    %263 = vector.broadcast %cst_51 : f32 to vector<8x128xf32>
    %264 = arith.addf %263, %262 : vector<8x128xf32>
    %265 = arith.divf %263, %264 : vector<8x128xf32>
    %266 = vector.extract_strided_slice %260 {offsets = [0, 64], sizes = [8, 32], strides = [1, 1]} : vector<8x128xf32> to vector<8x32xf32>
    %267 = math.tanh %266 : vector<8x32xf32>
    %268 = vector.extract_strided_slice %265 {offsets = [0, 32], sizes = [8, 32], strides = [1, 1]} : vector<8x128xf32> to vector<8x32xf32>
    %269 = arith.mulf %268, %228 : vector<8x32xf32>
    %270 = vector.extract_strided_slice %265 {offsets = [0, 0], sizes = [8, 32], strides = [1, 1]} : vector<8x128xf32> to vector<8x32xf32>
    %271 = arith.mulf %270, %267 : vector<8x32xf32>
    %272 = arith.addf %269, %271 : vector<8x32xf32>
    %273 = vector.extract_strided_slice %265 {offsets = [0, 96], sizes = [8, 32], strides = [1, 1]} : vector<8x128xf32> to vector<8x32xf32>
    %274 = math.tanh %272 : vector<8x32xf32>
    %275 = arith.mulf %273, %274 : vector<8x32xf32>
    %276 = arith.truncf %275 : vector<8x32xf32> to vector<8x32xbf16>
    %277 = vector.broadcast %4 : vector<1x32xf32> to vector<8x32xf32>
    %278 = arith.mulf %275, %277 : vector<8x32xf32>
    %cst_52 = arith.constant dense<0.000000e+00> : vector<8xf32>
    %279 = vector.multi_reduction <add>, %278, %cst_52 [1] : vector<8x32xf32> to vector<8xf32>
    %280 = vector.shape_cast %279 : vector<8xf32> to vector<8x1xf32>
    %281 = vector.extract_strided_slice %14 {offsets = [48, 0], sizes = [8, 128], strides = [1, 1]} : vector<64x128xf32> to vector<8x128xf32>
    %cst_53 = arith.constant dense<0.000000e+00> : vector<8x128xf32>
    %282 = tpu.matmul %255, %0, %cst_53 {dimension_numbers = #tpu.dot_dimension_numbers<[1], [0], [0], [1], [0, 0, 1, 1], [], []>} : vector<8x32xbf16>, vector<32x128xbf16>, vector<8x128xf32> -> vector<8x128xf32>
    %283 = arith.addf %281, %282 : vector<8x128xf32>
    %284 = arith.negf %283 : vector<8x128xf32>
    %285 = math.exp %284 : vector<8x128xf32>
    %cst_54 = arith.constant 1.000000e+00 : f32
    %286 = vector.broadcast %cst_54 : f32 to vector<8x128xf32>
    %287 = arith.addf %286, %285 : vector<8x128xf32>
    %288 = arith.divf %286, %287 : vector<8x128xf32>
    %289 = vector.extract_strided_slice %283 {offsets = [0, 64], sizes = [8, 32], strides = [1, 1]} : vector<8x128xf32> to vector<8x32xf32>
    %290 = math.tanh %289 : vector<8x32xf32>
    %291 = vector.extract_strided_slice %288 {offsets = [0, 32], sizes = [8, 32], strides = [1, 1]} : vector<8x128xf32> to vector<8x32xf32>
    %292 = arith.mulf %291, %251 : vector<8x32xf32>
    %293 = vector.extract_strided_slice %288 {offsets = [0, 0], sizes = [8, 32], strides = [1, 1]} : vector<8x128xf32> to vector<8x32xf32>
    %294 = arith.mulf %293, %290 : vector<8x32xf32>
    %295 = arith.addf %292, %294 : vector<8x32xf32>
    %296 = vector.extract_strided_slice %288 {offsets = [0, 96], sizes = [8, 32], strides = [1, 1]} : vector<8x128xf32> to vector<8x32xf32>
    %297 = math.tanh %295 : vector<8x32xf32>
    %298 = arith.mulf %296, %297 : vector<8x32xf32>
    %299 = arith.truncf %298 : vector<8x32xf32> to vector<8x32xbf16>
    %cst_55 = arith.constant dense<0.000000e+00> : vector<8x128xf32>
    %300 = tpu.matmul %299, %1, %cst_55 {dimension_numbers = #tpu.dot_dimension_numbers<[1], [0], [0], [1], [0, 0, 1, 1], [], []>} : vector<8x32xbf16>, vector<32x128xbf16>, vector<8x128xf32> -> vector<8x128xf32>
    %301 = vector.broadcast %3 : vector<1x128xf32> to vector<8x128xf32>
    %302 = arith.addf %300, %301 : vector<8x128xf32>
    %cst_56 = arith.constant dense<0.000000e+00> : vector<8x128xf32>
    %303 = tpu.matmul %276, %2, %cst_56 {dimension_numbers = #tpu.dot_dimension_numbers<[1], [0], [0], [1], [0, 0, 1, 1], [], []>} : vector<8x32xbf16>, vector<32x128xbf16>, vector<8x128xf32> -> vector<8x128xf32>
    %304 = arith.addf %302, %303 : vector<8x128xf32>
    %305 = arith.negf %304 : vector<8x128xf32>
    %306 = math.exp %305 : vector<8x128xf32>
    %cst_57 = arith.constant 1.000000e+00 : f32
    %307 = vector.broadcast %cst_57 : f32 to vector<8x128xf32>
    %308 = arith.addf %307, %306 : vector<8x128xf32>
    %309 = arith.divf %307, %308 : vector<8x128xf32>
    %310 = vector.extract_strided_slice %304 {offsets = [0, 64], sizes = [8, 32], strides = [1, 1]} : vector<8x128xf32> to vector<8x32xf32>
    %311 = math.tanh %310 : vector<8x32xf32>
    %312 = vector.extract_strided_slice %309 {offsets = [0, 32], sizes = [8, 32], strides = [1, 1]} : vector<8x128xf32> to vector<8x32xf32>
    %313 = arith.mulf %312, %272 : vector<8x32xf32>
    %314 = vector.extract_strided_slice %309 {offsets = [0, 0], sizes = [8, 32], strides = [1, 1]} : vector<8x128xf32> to vector<8x32xf32>
    %315 = arith.mulf %314, %311 : vector<8x32xf32>
    %316 = arith.addf %313, %315 : vector<8x32xf32>
    %317 = vector.extract_strided_slice %309 {offsets = [0, 96], sizes = [8, 32], strides = [1, 1]} : vector<8x128xf32> to vector<8x32xf32>
    %318 = math.tanh %316 : vector<8x32xf32>
    %319 = arith.mulf %317, %318 : vector<8x32xf32>
    %320 = arith.truncf %319 : vector<8x32xf32> to vector<8x32xbf16>
    %321 = vector.broadcast %4 : vector<1x32xf32> to vector<8x32xf32>
    %322 = arith.mulf %319, %321 : vector<8x32xf32>
    %cst_58 = arith.constant dense<0.000000e+00> : vector<8xf32>
    %323 = vector.multi_reduction <add>, %322, %cst_58 [1] : vector<8x32xf32> to vector<8xf32>
    %324 = vector.shape_cast %323 : vector<8xf32> to vector<8x1xf32>
    %325 = vector.extract_strided_slice %14 {offsets = [56, 0], sizes = [8, 128], strides = [1, 1]} : vector<64x128xf32> to vector<8x128xf32>
    %cst_59 = arith.constant dense<0.000000e+00> : vector<8x128xf32>
    %326 = tpu.matmul %299, %0, %cst_59 {dimension_numbers = #tpu.dot_dimension_numbers<[1], [0], [0], [1], [0, 0, 1, 1], [], []>} : vector<8x32xbf16>, vector<32x128xbf16>, vector<8x128xf32> -> vector<8x128xf32>
    %327 = arith.addf %325, %326 : vector<8x128xf32>
    %328 = arith.negf %327 : vector<8x128xf32>
    %329 = math.exp %328 : vector<8x128xf32>
    %cst_60 = arith.constant 1.000000e+00 : f32
    %330 = vector.broadcast %cst_60 : f32 to vector<8x128xf32>
    %331 = arith.addf %330, %329 : vector<8x128xf32>
    %332 = arith.divf %330, %331 : vector<8x128xf32>
    %333 = vector.extract_strided_slice %327 {offsets = [0, 64], sizes = [8, 32], strides = [1, 1]} : vector<8x128xf32> to vector<8x32xf32>
    %334 = math.tanh %333 : vector<8x32xf32>
    %335 = vector.extract_strided_slice %332 {offsets = [0, 32], sizes = [8, 32], strides = [1, 1]} : vector<8x128xf32> to vector<8x32xf32>
    %336 = arith.mulf %335, %295 : vector<8x32xf32>
    %337 = vector.extract_strided_slice %332 {offsets = [0, 0], sizes = [8, 32], strides = [1, 1]} : vector<8x128xf32> to vector<8x32xf32>
    %338 = arith.mulf %337, %334 : vector<8x32xf32>
    %339 = arith.addf %336, %338 : vector<8x32xf32>
    %340 = vector.extract_strided_slice %332 {offsets = [0, 96], sizes = [8, 32], strides = [1, 1]} : vector<8x128xf32> to vector<8x32xf32>
    %341 = math.tanh %339 : vector<8x32xf32>
    %342 = arith.mulf %340, %341 : vector<8x32xf32>
    %343 = arith.truncf %342 : vector<8x32xf32> to vector<8x32xbf16>
    %cst_61 = arith.constant dense<0.000000e+00> : vector<8x128xf32>
    %344 = tpu.matmul %343, %1, %cst_61 {dimension_numbers = #tpu.dot_dimension_numbers<[1], [0], [0], [1], [0, 0, 1, 1], [], []>} : vector<8x32xbf16>, vector<32x128xbf16>, vector<8x128xf32> -> vector<8x128xf32>
    %345 = vector.broadcast %3 : vector<1x128xf32> to vector<8x128xf32>
    %346 = arith.addf %344, %345 : vector<8x128xf32>
    %cst_62 = arith.constant dense<0.000000e+00> : vector<8x128xf32>
    %347 = tpu.matmul %320, %2, %cst_62 {dimension_numbers = #tpu.dot_dimension_numbers<[1], [0], [0], [1], [0, 0, 1, 1], [], []>} : vector<8x32xbf16>, vector<32x128xbf16>, vector<8x128xf32> -> vector<8x128xf32>
    %348 = arith.addf %346, %347 : vector<8x128xf32>
    %349 = arith.negf %348 : vector<8x128xf32>
    %350 = math.exp %349 : vector<8x128xf32>
    %cst_63 = arith.constant 1.000000e+00 : f32
    %351 = vector.broadcast %cst_63 : f32 to vector<8x128xf32>
    %352 = arith.addf %351, %350 : vector<8x128xf32>
    %353 = arith.divf %351, %352 : vector<8x128xf32>
    %354 = vector.extract_strided_slice %348 {offsets = [0, 64], sizes = [8, 32], strides = [1, 1]} : vector<8x128xf32> to vector<8x32xf32>
    %355 = math.tanh %354 : vector<8x32xf32>
    %356 = vector.extract_strided_slice %353 {offsets = [0, 32], sizes = [8, 32], strides = [1, 1]} : vector<8x128xf32> to vector<8x32xf32>
    %357 = arith.mulf %356, %316 : vector<8x32xf32>
    %358 = vector.extract_strided_slice %353 {offsets = [0, 0], sizes = [8, 32], strides = [1, 1]} : vector<8x128xf32> to vector<8x32xf32>
    %359 = arith.mulf %358, %355 : vector<8x32xf32>
    %360 = arith.addf %357, %359 : vector<8x32xf32>
    %361 = vector.extract_strided_slice %353 {offsets = [0, 96], sizes = [8, 32], strides = [1, 1]} : vector<8x128xf32> to vector<8x32xf32>
    %362 = math.tanh %360 : vector<8x32xf32>
    %363 = arith.mulf %361, %362 : vector<8x32xf32>
    %364 = vector.broadcast %4 : vector<1x32xf32> to vector<8x32xf32>
    %365 = arith.mulf %363, %364 : vector<8x32xf32>
    %cst_64 = arith.constant dense<0.000000e+00> : vector<8xf32>
    %366 = vector.multi_reduction <add>, %365, %cst_64 [1] : vector<8x32xf32> to vector<8xf32>
    %367 = vector.shape_cast %366 : vector<8xf32> to vector<8x1xf32>
    %368 = arith.maximumf %60, %104 : vector<8x1xf32>
    %369 = arith.maximumf %368, %148 : vector<8x1xf32>
    %370 = arith.maximumf %369, %192 : vector<8x1xf32>
    %371 = arith.maximumf %370, %236 : vector<8x1xf32>
    %372 = arith.maximumf %371, %280 : vector<8x1xf32>
    %373 = arith.maximumf %372, %324 : vector<8x1xf32>
    %374 = arith.maximumf %373, %367 : vector<8x1xf32>
    %375 = arith.subf %60, %374 : vector<8x1xf32>
    %376 = math.exp %375 : vector<8x1xf32>
    %377 = arith.subf %104, %374 : vector<8x1xf32>
    %378 = math.exp %377 : vector<8x1xf32>
    %379 = arith.subf %148, %374 : vector<8x1xf32>
    %380 = math.exp %379 : vector<8x1xf32>
    %381 = arith.subf %192, %374 : vector<8x1xf32>
    %382 = math.exp %381 : vector<8x1xf32>
    %383 = arith.subf %236, %374 : vector<8x1xf32>
    %384 = math.exp %383 : vector<8x1xf32>
    %385 = arith.subf %280, %374 : vector<8x1xf32>
    %386 = math.exp %385 : vector<8x1xf32>
    %387 = arith.subf %324, %374 : vector<8x1xf32>
    %388 = math.exp %387 : vector<8x1xf32>
    %389 = arith.subf %367, %374 : vector<8x1xf32>
    %390 = math.exp %389 : vector<8x1xf32>
    %391 = arith.addf %376, %378 : vector<8x1xf32>
    %392 = arith.addf %391, %380 : vector<8x1xf32>
    %393 = arith.addf %392, %382 : vector<8x1xf32>
    %394 = arith.addf %393, %384 : vector<8x1xf32>
    %395 = arith.addf %394, %386 : vector<8x1xf32>
    %396 = arith.addf %395, %388 : vector<8x1xf32>
    %397 = arith.addf %396, %390 : vector<8x1xf32>
    %398 = tpu.reciprocal %397 {approx = true} : vector<8x1xf32> -> vector<8x1xf32>
    %399 = arith.mulf %376, %398 : vector<8x1xf32>
    %400 = vector.broadcast %399 : vector<8x1xf32> to vector<8x32xf32>
    %401 = arith.mulf %400, %55 : vector<8x32xf32>
    %402 = arith.mulf %378, %398 : vector<8x1xf32>
    %403 = vector.broadcast %402 : vector<8x1xf32> to vector<8x32xf32>
    %404 = arith.mulf %403, %99 : vector<8x32xf32>
    %405 = arith.addf %401, %404 : vector<8x32xf32>
    %406 = arith.mulf %380, %398 : vector<8x1xf32>
    %407 = vector.broadcast %406 : vector<8x1xf32> to vector<8x32xf32>
    %408 = arith.mulf %407, %143 : vector<8x32xf32>
    %409 = arith.addf %405, %408 : vector<8x32xf32>
    %410 = arith.mulf %382, %398 : vector<8x1xf32>
    %411 = vector.broadcast %410 : vector<8x1xf32> to vector<8x32xf32>
    %412 = arith.mulf %411, %187 : vector<8x32xf32>
    %413 = arith.addf %409, %412 : vector<8x32xf32>
    %414 = arith.mulf %384, %398 : vector<8x1xf32>
    %415 = vector.broadcast %414 : vector<8x1xf32> to vector<8x32xf32>
    %416 = arith.mulf %415, %231 : vector<8x32xf32>
    %417 = arith.addf %413, %416 : vector<8x32xf32>
    %418 = arith.mulf %386, %398 : vector<8x1xf32>
    %419 = vector.broadcast %418 : vector<8x1xf32> to vector<8x32xf32>
    %420 = arith.mulf %419, %275 : vector<8x32xf32>
    %421 = arith.addf %417, %420 : vector<8x32xf32>
    %422 = arith.mulf %388, %398 : vector<8x1xf32>
    %423 = vector.broadcast %422 : vector<8x1xf32> to vector<8x32xf32>
    %424 = arith.mulf %423, %319 : vector<8x32xf32>
    %425 = arith.addf %421, %424 : vector<8x32xf32>
    %426 = arith.mulf %390, %398 : vector<8x1xf32>
    %427 = vector.broadcast %426 : vector<8x1xf32> to vector<8x32xf32>
    %428 = arith.mulf %427, %363 : vector<8x32xf32>
    %429 = arith.addf %425, %428 : vector<8x32xf32>
    %c0_65 = arith.constant 0 : index
    %c0_66 = arith.constant 0 : index
    %430 = vector.load %arg1[%c0_65, %c0_66] : memref<16x16xf32, #tpu.memory_space<vmem>>, vector<8x10xf32>
    %431 = arith.truncf %430 : vector<8x10xf32> to vector<8x10xbf16>
    %c8_67 = arith.constant 8 : index
    %c0_68 = arith.constant 0 : index
    %432 = vector.load %arg1[%c8_67, %c0_68] : memref<16x16xf32, #tpu.memory_space<vmem>>, vector<8x12xf32>
    %433 = arith.truncf %432 : vector<8x12xf32> to vector<8x12xbf16>
    %c120 = arith.constant 120 : index
    %c0_69 = arith.constant 0 : index
    %434 = vector.load %arg3[%c120, %c0_69] : memref<256x128xbf16, #tpu.memory_space<vmem>>, vector<12x8xbf16>
    %cst_70 = arith.constant dense<0.000000e+00> : vector<8x8xf32>
    %435 = tpu.matmul %433, %434, %cst_70 {dimension_numbers = #tpu.dot_dimension_numbers<[1], [0], [0], [1], [0, 0, 1, 1], [], []>} : vector<8x12xbf16>, vector<12x8xbf16>, vector<8x8xf32> -> vector<8x8xf32>
    %c16_71 = arith.constant 16 : index
    %c0_72 = arith.constant 0 : index
    %436 = vector.load %arg4[%c16_71, %c0_72] : memref<48x128xf32, #tpu.memory_space<vmem>>, vector<1x8xf32>
    %437 = vector.broadcast %436 : vector<1x8xf32> to vector<8x8xf32>
    %438 = arith.addf %435, %437 : vector<8x8xf32>
    %cst_73 = arith.constant 0.000000e+00 : f32
    %439 = vector.broadcast %cst_73 : f32 to vector<8x8xf32>
    %440 = arith.maximumf %438, %439 : vector<8x8xf32>
    %441 = arith.truncf %429 : vector<8x32xf32> to vector<8x32xbf16>
    %c136 = arith.constant 136 : index
    %c0_74 = arith.constant 0 : index
    %442 = vector.load %arg3[%c136, %c0_74] : memref<256x128xbf16, #tpu.memory_space<vmem>>, vector<32x32xbf16>
    %cst_75 = arith.constant dense<0.000000e+00> : vector<8x32xf32>
    %443 = tpu.matmul %441, %442, %cst_75 {dimension_numbers = #tpu.dot_dimension_numbers<[1], [0], [0], [1], [0, 0, 1, 1], [], []>} : vector<8x32xbf16>, vector<32x32xbf16>, vector<8x32xf32> -> vector<8x32xf32>
    %444 = arith.truncf %363 : vector<8x32xf32> to vector<8x32xbf16>
    %c168 = arith.constant 168 : index
    %c0_76 = arith.constant 0 : index
    %445 = vector.load %arg3[%c168, %c0_76] : memref<256x128xbf16, #tpu.memory_space<vmem>>, vector<32x32xbf16>
    %cst_77 = arith.constant dense<0.000000e+00> : vector<8x32xf32>
    %446 = tpu.matmul %444, %445, %cst_77 {dimension_numbers = #tpu.dot_dimension_numbers<[1], [0], [0], [1], [0, 0, 1, 1], [], []>} : vector<8x32xbf16>, vector<32x32xbf16>, vector<8x32xf32> -> vector<8x32xf32>
    %447 = arith.addf %443, %446 : vector<8x32xf32>
    %c200 = arith.constant 200 : index
    %c0_78 = arith.constant 0 : index
    %448 = vector.load %arg3[%c200, %c0_78] : memref<256x128xbf16, #tpu.memory_space<vmem>>, vector<10x32xbf16>
    %cst_79 = arith.constant dense<0.000000e+00> : vector<8x32xf32>
    %449 = tpu.matmul %431, %448, %cst_79 {dimension_numbers = #tpu.dot_dimension_numbers<[1], [0], [0], [1], [0, 0, 1, 1], [], []>} : vector<8x10xbf16>, vector<10x32xbf16>, vector<8x32xf32> -> vector<8x32xf32>
    %450 = arith.addf %447, %449 : vector<8x32xf32>
    %451 = arith.truncf %440 : vector<8x8xf32> to vector<8x8xbf16>
    %c216 = arith.constant 216 : index
    %c0_80 = arith.constant 0 : index
    %452 = vector.load %arg3[%c216, %c0_80] : memref<256x128xbf16, #tpu.memory_space<vmem>>, vector<8x32xbf16>
    %cst_81 = arith.constant dense<0.000000e+00> : vector<8x32xf32>
    %453 = tpu.matmul %451, %452, %cst_81 {dimension_numbers = #tpu.dot_dimension_numbers<[1], [0], [0], [1], [0, 0, 1, 1], [], []>} : vector<8x8xbf16>, vector<8x32xbf16>, vector<8x32xf32> -> vector<8x32xf32>
    %454 = arith.addf %450, %453 : vector<8x32xf32>
    %c24_82 = arith.constant 24 : index
    %c0_83 = arith.constant 0 : index
    %455 = vector.load %arg4[%c24_82, %c0_83] : memref<48x128xf32, #tpu.memory_space<vmem>>, vector<1x32xf32>
    %456 = vector.broadcast %455 : vector<1x32xf32> to vector<8x32xf32>
    %457 = arith.addf %454, %456 : vector<8x32xf32>
    %458 = arith.truncf %457 : vector<8x32xf32> to vector<8x32xbf16>
    %c224 = arith.constant 224 : index
    %c0_84 = arith.constant 0 : index
    %459 = vector.load %arg3[%c224, %c0_84] : memref<256x128xbf16, #tpu.memory_space<vmem>>, vector<32x128xbf16>
    %cst_85 = arith.constant dense<0.000000e+00> : vector<8x128xf32>
    %460 = tpu.matmul %458, %459, %cst_85 {dimension_numbers = #tpu.dot_dimension_numbers<[1], [0], [0], [1], [0, 0, 1, 1], [], []>} : vector<8x32xbf16>, vector<32x128xbf16>, vector<8x128xf32> -> vector<8x128xf32>
    %c32 = arith.constant 32 : index
    %c0_86 = arith.constant 0 : index
    %461 = vector.load %arg4[%c32, %c0_86] : memref<48x128xf32, #tpu.memory_space<vmem>>, vector<1x128xf32>
    %462 = vector.broadcast %461 : vector<1x128xf32> to vector<8x128xf32>
    %463 = arith.addf %460, %462 : vector<8x128xf32>
    %c0_87 = arith.constant 0 : index
    %c0_88 = arith.constant 0 : index
    %464 = vector.load %arg5[%c0_87, %c0_88] : memref<16x128xf32, #tpu.memory_space<vmem>>, vector<8x128xf32>
    tpu.vector_store %arg5[%c0_87, %c0_88], %463 {strides = array<i32>} : memref<16x128xf32, #tpu.memory_space<vmem>>, vector<8x128xf32>,
    %465 = tpu.concatenate %342, %363, %339, %360 in 1 : vector<8x32xf32>, vector<8x32xf32>, vector<8x32xf32>, vector<8x32xf32> -> vector<8x128xf32>
    %c8_89 = arith.constant 8 : index
    %c0_90 = arith.constant 0 : index
    %466 = vector.load %arg5[%c8_89, %c0_90] : memref<16x128xf32, #tpu.memory_space<vmem>>, vector<8x128xf32>
    tpu.vector_store %arg5[%c8_89, %c0_90], %465 {strides = array<i32>} : memref<16x128xf32, #tpu.memory_space<vmem>>, vector<8x128xf32>,
    return
  }
}

</mosaic_0001>

<llo_original>
// kernel: tpu_custom_call.1
$region0: #{tpu_custom_call.1}
  #allocation0 [shape = 'u32[]', space=smem, size = 0x4, offset = 0x4, fixed_abs, tag = 'smem constant byte address 0x4 - core index']
  #allocation1 [shape = 'u32[144,128]{1,0:T(1,128)}', space=vmem, size = 0x12000, scoped, tag = 'internal scratch']
  %s0 = inlined_call_operand.vmem [shape: bf16[64,24], index: 0, kind: input, shape index: {}]
  %s1 = inlined_call_operand.hbm [shape: f32[16,16], index: 1, kind: input, shape index: {}]
  %s2 = inlined_call_operand.hbm [shape: f32[32,32], index: 2, kind: input, shape index: {}]
  %s3 = inlined_call_operand.hbm [shape: bf16[256,128], index: 3, kind: input, shape index: {}]
  %s4 = inlined_call_operand.vmem [shape: f32[48,128], index: 4, kind: input, shape index: {}]
  %s5 = inlined_call_operand.hbm [shape: f32[16,128], index: 5, kind: output, shape index: {}]
  %s6 = sld [smem:[#allocation0]]
  $region42: #{tpu_custom_call.1} parent=0
    _
  %s8 = ssub.s32 1, %s6
  %s9 = scalar_select 0, %s8, %s6
  $region1: #{tpu_custom_call.1} parent=0
    #allocation2 [shape = 'u8[8192]{0}', space=vmem, size = 0x2000, scoped, tag = 'input window, operand 1, single buffered']
    #allocation3 [shape = 's32[1]{0}', space=sflag, size = 0x4, scoped, tag = 'scoped memory for tpu_custom_call.1']
    #allocation4 [shape = 's32[1]{0}', space=sflag, size = 0x4, scoped, tag = 'scoped memory for tpu_custom_call.1']
    #allocation5 [shape = 'u8[16384]{0}', space=vmem, size = 0x4000, scoped, tag = 'input window, operand 2, single buffered']
    #allocation6 [shape = 's32[1]{0}', space=sflag, size = 0x4, scoped, tag = 'scoped memory for tpu_custom_call.1']
    #allocation7 [shape = 'u8[65536]{0}', space=vmem, size = 0x10000, scoped, tag = 'input window, operand 3, single buffered']
    #allocation8 [shape = 'u8[8192]{0}', space=vmem, size = 0x2000, scoped, tag = 'output window, operand 0, single buffered']
    %10 = vsyncpa [#allocation3], 0
    %11 = vsyncpa [#allocation6], 0
    %12 = vsyncpa [#allocation4], 0
    // Predicated region
    $region2: #{tpu_custom_call.1} parent=1 // pred_check
      _
    $region3: #{tpu_custom_call.1} parent=1 // pred_check_branch
      %14 = sbr.rel (0) target = $region5
    $region4: #{tpu_custom_call.1} parent=1 // pred_region
      _
    $region5: #{tpu_custom_call.1} parent=1 // pred_fallthru
      _
    // Predicated region
    $region6: #{tpu_custom_call.1} parent=1 // pred_check
      _
    $region7: #{tpu_custom_call.1} parent=1 // pred_check_branch
      %16 = sbr.rel (0) target = $region9
    $region8: #{tpu_custom_call.1} parent=1 // pred_region
      %s18 = ssub.s32 256, 256
      %19 = vsyncadd [#allocation3], %s18
      %s20 = sshll.u32 [#allocation2], 4
      %s21 = int_to_ptr.vmem [resolvable:$true] %s20
      %26 = dma.hbm_to_vmem [thread:$0]  %s1, 256, %s21, [#allocation3], 128, 128, 8
    $region9: #{tpu_custom_call.1} parent=1 // pred_fallthru
      _
    // Predicated region
    $region10: #{tpu_custom_call.1} parent=1 // pred_check
      _
    $region11: #{tpu_custom_call.1} parent=1 // pred_check_branch
      %28 = sbr.rel (0) target = $region13
    $region12: #{tpu_custom_call.1} parent=1 // pred_region
      %s30 = ssub.s32 512, 512
      %31 = vsyncadd [#allocation6], %s30
      %s32 = sshll.u32 [#allocation5], 4
      %s33 = int_to_ptr.vmem [resolvable:$true] %s32
      %38 = dma.hbm_to_vmem [thread:$0]  %s2, 512, %s33, [#allocation6], 128, 128, 8
    $region13: #{tpu_custom_call.1} parent=1 // pred_fallthru
      _
    // Predicated region
    $region14: #{tpu_custom_call.1} parent=1 // pred_check
      _
    $region15: #{tpu_custom_call.1} parent=1 // pred_check_branch
      %40 = sbr.rel (0) target = $region17
    $region16: #{tpu_custom_call.1} parent=1 // pred_region
      %s42 = ssub.s32 2048, 2048
      %43 = vsyncadd [#allocation6], %s42
      %s44 = sshll.u32 [#allocation7], 4
      %s45 = int_to_ptr.vmem [resolvable:$true] %s44
      %50 = dma.hbm_to_vmem [thread:$0]  %s3, 2048, %s45, [#allocation6], 64, 64, 4
    $region17: #{tpu_custom_call.1} parent=1 // pred_fallthru
      _
    // Predicated region
    $region18: #{tpu_custom_call.1} parent=1 // pred_check
      _
    $region19: #{tpu_custom_call.1} parent=1 // pred_check_branch
      %52 = sbr.rel (0) target = $region21
    $region20: #{tpu_custom_call.1} parent=1 // pred_region
      _
    $region21: #{tpu_custom_call.1} parent=1 // pred_fallthru
      _
    // Predicated region
    $region22: #{tpu_custom_call.1} parent=1 // pred_check
      _
    $region23: #{tpu_custom_call.1} parent=1 // pred_check_branch
      %54 = sbr.rel (0) target = $region25
    $region24: #{tpu_custom_call.1} parent=1 // pred_region
      %55 = dma.done [#allocation3], 256
    $region25: #{tpu_custom_call.1} parent=1 // pred_fallthru
      _
    // Predicated region
    $region26: #{tpu_custom_call.1} parent=1 // pred_check
      _
    $region27: #{tpu_custom_call.1} parent=1 // pred_check_branch
      %57 = sbr.rel (0) target = $region29
    $region28: #{tpu_custom_call.1} parent=1 // pred_region
      %58 = dma.done [#allocation6], 512
    $region29: #{tpu_custom_call.1} parent=1 // pred_fallthru
      _
    // Predicated region
    $region30: #{tpu_custom_call.1} parent=1 // pred_check
      _
    $region31: #{tpu_custom_call.1} parent=1 // pred_check_branch
      %60 = sbr.rel (0) target = $region33
    $region32: #{tpu_custom_call.1} parent=1 // pred_region
      %61 = dma.done [#allocation6], 2048
    $region33: #{tpu_custom_call.1} parent=1 // pred_fallthru
      _
    %v63 = vld [vmem:[#allocation7 + $0xc] sm:$0xf]
    %v64 = vld [vmem:[#allocation7 + $0x10] sm:$0xf]
    %v65 = vld [vmem:[#allocation7 + $0x14] sm:$0xf]
    %v66 = vld [vmem:[#allocation7 + $0x18] sm:$0xf]
    %v67 = vld [vmem:[#allocation7 + $0x1c] sm:$0xf]
    %v68 = vld [vmem:[#allocation7 + $0x20] sm:$0xf]
    %v69 = vld [vmem:[#allocation7 + $0x24] sm:$0xf]
    %v70 = vld [vmem:[#allocation7 + $0x28] sm:$0xf]
    %v71 = vld [vmem:[#allocation7 + $0x2c] sm:$0xf]
    %v72 = vld [vmem:[#allocation7 + $0x30] sm:$0xf]
    %v73 = vld [vmem:[#allocation7 + $0x34] sm:$0xf]
    %v74 = vld [vmem:[#allocation7 + $0x38] sm:$0xf]
    %v75 = vld [vmem:[%s4 + $0x8] sm:$0x1]
    %v76 = vld [vmem:[%s4 + $0x28] sm:$0x1]
    %v77 = vld [vmem:[#allocation5] sm:$0xff]
    %v78 = vld [vmem:[#allocation5 + $0x8] sm:$0xff]
    %v79 = vld [vmem:[#allocation5 + $0x10] sm:$0xff]
    %v80 = vld [vmem:[#allocation5 + $0x18] sm:$0xff]
    %v81 = vld [vmem:[%s0] sm:$0xf]
    %v82 = vld [vmem:[%s0 + $0x4] sm:$0xf]
    %v83 = vld [vmem:[%s0 + $0x8] sm:$0xf]
    %v84 = vld [vmem:[%s0 + $0xc] sm:$0xf]
    %v85 = vld [vmem:[%s0 + $0x10] sm:$0xf]
    %v86 = vld [vmem:[%s0 + $0x14] sm:$0xf]
    %v87 = vld [vmem:[%s0 + $0x18] sm:$0xf]
    %v88 = vld [vmem:[%s0 + $0x1c] sm:$0xf]
    %v89 = vld [vmem:[#allocation7] sm:$0xf]
    %v90 = vld [vmem:[#allocation7 + $0x4] sm:$0xf]
    %v91 = vld [vmem:[#allocation7 + $0x8] sm:$0xf]
    %v92 = vld [vmem:[%s4] sm:$0x1]
    %v93 = vlaneseq
    %v94 = vshrl.u32 %v93, 7
    %v95 = vsub.s32 0, %v94
    %v96 = vrot.slane %v92, %v95
    %v105 = vunpack.c.l.b16 %v81
    %v106 = vunpack.c.l.b16 %v82
    %v107 = vunpack.c.l.b16 %v83
    %v108 = vunpack.c.l.b16 %v84
    %v109 = vunpack.c.l.b16 %v85
    %v110 = vunpack.c.l.b16 %v86
    %v111 = vunpack.c.l.b16 %v87
    %v112 = vunpack.c.l.b16 %v88
    %v113 = vpack.c.b16 %v106, %v105
    %v114 = vpack.c.b16 %v108, %v107
    %v115 = vpack.c.b16 %v110, %v109
    %v116 = vpack.c.b16 %v112, %v111
    %v120 = vunpack.c.l.b16 %v89
    %v121 = vunpack.c.l.b16 %v90
    %v122 = vunpack.c.l.b16 %v91
    %v123 = vpack.c.b16 %v121, %v120
    %v124 = vpack.c.b16 %v122, %v122
    %vm126 = vcmask 195584
    %v128 = vsel %vm126, %v113, 0
    %v131 = vsel %vm126, %v114, 0
    %v134 = vsel %vm126, %v115, 0
    %v137 = vsel %vm126, %v116, 0
    %vm139 = vcmask 1043456
    %v141 = vsel %vm139, %v124, 0
    %143 = vmatprep.subr.bf16.mxu0 0
    %144 = vmatpush1.bf16.msra.mxu0 %v123
    %145 = vmatprep.subr.bf16.mxu0 0
    %146 = vmatpush1.bf16.msra.mxu0 %v141
    %147 = vmatprep.subr.bf16.mxu0 0
    %148 = vmatpush1.bf16.msra.mxu0 0
    %149 = vmatprep.subr.bf16.mxu0 0
    %150 = vmatpush1.bf16.msra.mxu0 0
    %151 = vmatprep.subr.bf16.mxu0 0
    %152 = vmatpush1.bf16.msra.mxu0 0
    %153 = vmatprep.subr.bf16.mxu0 0
    %154 = vmatpush1.bf16.msra.mxu0 0
    %155 = vmatprep.subr.bf16.mxu0 0
    %156 = vmatpush1.bf16.msra.mxu0 0
    %157 = vmatprep.subr.bf16.mxu0 0
    %158 = vmatpush1.bf16.msra.mxu0 0
    %159 = vmatprep.subr.bf16.mxu0 0
    %160 = vmatpush1.bf16.msra.mxu0 0
    %161 = vmatprep.subr.bf16.mxu0 0
    %162 = vmatpush1.bf16.msra.mxu0 0
    %163 = vmatprep.subr.bf16.mxu0 0
    %164 = vmatpush1.bf16.msra.mxu0 0
    %165 = vmatprep.subr.bf16.mxu0 0
    %166 = vmatpush1.bf16.msra.mxu0 0
    %167 = vmatprep.subr.bf16.mxu0 0
    %168 = vmatpush1.bf16.msra.mxu0 0
    %169 = vmatprep.subr.bf16.mxu0 0
    %170 = vmatpush1.bf16.msra.mxu0 0
    %171 = vmatprep.subr.bf16.mxu0 0
    %172 = vmatpush1.bf16.msra.mxu0 0
    %173 = vmatprep.subr.bf16.mxu0 0
    %174 = vmatpush1.bf16.msra.mxu0 0
    %175 = vmatprep.mubr.bf16.mxu0 0
    %176 = vmatmul.mubr.bf16.gmra.mrb[0].mxu0 %v128
    %v177 = vpop.f32.mrb[0].mxu0
    %v178 = vadd.f32 %v96, %v177
    %v179 = vpop.f32.mrb[0].mxu0
    %v180 = vpop.f32.mrb[0].mxu0
    %v181 = vadd.f32 %v96, %v180
    %v182 = vpop.f32.mrb[0].mxu0
    %183 = vmatprep.mubr.bf16.mxu0 0
    %184 = vmatmul.mubr.bf16.gmra.mrb[0].mxu0 %v131
    %v185 = vpop.f32.mrb[0].mxu0
    %v186 = vadd.f32 %v96, %v185
    %v187 = vpop.f32.mrb[0].mxu0
    %v188 = vpop.f32.mrb[0].mxu0
    %v189 = vadd.f32 %v96, %v188
    %v190 = vpop.f32.mrb[0].mxu0
    %191 = vmatprep.mubr.bf16.mxu0 0
    %192 = vmatmul.mubr.bf16.gmra.mrb[0].mxu0 %v134
    %v193 = vpop.f32.mrb[0].mxu0
    %v194 = vadd.f32 %v96, %v193
    %v195 = vpop.f32.mrb[0].mxu0
    %v196 = vpop.f32.mrb[0].mxu0
    %v197 = vadd.f32 %v96, %v196
    %v198 = vpop.f32.mrb[0].mxu0
    %199 = vmatprep.mubr.bf16.mxu0 0
    %200 = vmatmul.mubr.bf16.gmra.mrb[0].mxu0 %v137
    %v201 = vpop.f32.mrb[0].mxu0
    %v202 = vadd.f32 %v96, %v201
    %v203 = vpop.f32.mrb[0].mxu0
    %v204 = vpop.f32.mrb[0].mxu0
    %v205 = vadd.f32 %v96, %v204
    %v206 = vpop.f32.mrb[0].mxu0
    %207 = vdwg.mxu0
    %v208 = vpack.c.bf16 %v77, %v77
    %v209 = vpack.c.bf16 %v78, %v78
    %v214 = vunpack.c.l.b16 %v63
    %v215 = vunpack.c.l.b16 %v64
    %v216 = vunpack.c.l.b16 %v65
    %v217 = vunpack.c.l.b16 %v66
    %v218 = vpack.c.b16 %v215, %v214
    %v219 = vpack.c.b16 %v217, %v216
    %vm222 = vcmask 261120
    %v224 = vsel %vm222, %v208, 0
    %226 = vmatprep.subr.bf16.mxu0 0
    %227 = vmatpush1.bf16.msra.mxu0 %v218
    %228 = vmatprep.subr.bf16.mxu0 0
    %229 = vmatpush1.bf16.msra.mxu0 %v219
    %230 = vmatprep.subr.bf16.mxu0 0
    %231 = vmatpush1.bf16.msra.mxu0 0
    %232 = vmatprep.subr.bf16.mxu0 0
    %233 = vmatpush1.bf16.msra.mxu0 0
    %234 = vmatprep.subr.bf16.mxu0 0
    %235 = vmatpush1.bf16.msra.mxu0 0
    %236 = vmatprep.subr.bf16.mxu0 0
    %237 = vmatpush1.bf16.msra.mxu0 0
    %238 = vmatprep.subr.bf16.mxu0 0
    %239 = vmatpush1.bf16.msra.mxu0 0
    %240 = vmatprep.subr.bf16.mxu0 0
    %241 = vmatpush1.bf16.msra.mxu0 0
    %242 = vmatprep.subr.bf16.mxu0 0
    %243 = vmatpush1.bf16.msra.mxu0 0
    %244 = vmatprep.subr.bf16.mxu0 0
    %245 = vmatpush1.bf16.msra.mxu0 0
    %246 = vmatprep.subr.bf16.mxu0 0
    %247 = vmatpush1.bf16.msra.mxu0 0
    %248 = vmatprep.subr.bf16.mxu0 0
    %249 = vmatpush1.bf16.msra.mxu0 0
    %250 = vmatprep.subr.bf16.mxu0 0
    %251 = vmatpush1.bf16.msra.mxu0 0
    %252 = vmatprep.subr.bf16.mxu0 0
    %253 = vmatpush1.bf16.msra.mxu0 0
    %254 = vmatprep.subr.bf16.mxu0 0
    %255 = vmatpush1.bf16.msra.mxu0 0
    %256 = vmatprep.subr.bf16.mxu0 0
    %257 = vmatpush1.bf16.msra.mxu0 0
    %258 = vmatprep.mubr.bf16.mxu0 0
    %259 = vmatmul.mubr.bf16.gmra.mrb[0].mxu0 %v224
    %v260 = vpop.f32.mrb[0].mxu0
    %v261 = vadd.f32 0.0, %v260
    %v262 = vpop.f32.mrb[0].mxu0
    %v263 = vpop.f32.mrb[0].mxu0
    %v264 = vpop.f32.mrb[0].mxu0
    %265 = vdwg.mxu0
    %v266 = vadd.f32 %v178, %v261
    %v267 = vxor.u32 %v266, 2147483648
    %v268 = vmul.f32 %v267, 1.442695
    %v269 = vpow.pop %v268
    %v270 = vadd.f32 %v269, 1.0
    %v271 = vrcp.pop %v270
    %v272 = vmul.f32 1.0, %v271
    %v273 = vtanh.pop %v266
    %275 = vrot.lane.b32.xlu0 %v79, 32
    %v276 = vpop.permute.xlu0 %275
    %v278 = vmul.f32 %v272, %v276
    %280 = vrot.lane.b32.xlu0 %v273, 64
    %v281 = vpop.permute.xlu0 %280
    %v283 = vmul.f32 %v272, %v281
    %285 = vrot.lane.b32.xlu0 %v283, 32
    %v286 = vpop.permute.xlu0 %285
    %v288 = vadd.f32 %v278, %v286
    %v289 = vtanh.pop %v288
    %291 = vrot.lane.b32.xlu0 %v289, 64
    %v292 = vpop.permute.xlu0 %291
    %v294 = vmul.f32 %v272, %v292
    %v295 = vpack.c.bf16 %v294, %v294
    %v296 = vlaneseq
    %v297 = vshrl.u32 %v296, 7
    %v298 = vsub.s32 0, %v297
    %v299 = vrot.slane %v75, %v298
    %301 = vrot.lane.b32.xlu0 %v295, 32
    %v302 = vpop.permute.xlu0 %301
    %v307 = vunpack.c.l.b16 %v67
    %v308 = vunpack.c.l.b16 %v68
    %v309 = vunpack.c.l.b16 %v69
    %v310 = vunpack.c.l.b16 %v70
    %v311 = vpack.c.b16 %v308, %v307
    %v312 = vpack.c.b16 %v310, %v309
    %v316 = vsel %vm222, %v302, 0
    %318 = vmatprep.subr.bf16.mxu0 0
    %319 = vmatpush1.bf16.msra.mxu0 %v311
    %320 = vmatprep.subr.bf16.mxu0 0
    %321 = vmatpush1.bf16.msra.mxu0 %v312
    %322 = vmatprep.subr.bf16.mxu0 0
    %323 = vmatpush1.bf16.msra.mxu0 0
    %324 = vmatprep.subr.bf16.mxu0 0
    %325 = vmatpush1.bf16.msra.mxu0 0
    %326 = vmatprep.subr.bf16.mxu0 0
    %327 = vmatpush1.bf16.msra.mxu0 0
    %328 = vmatprep.subr.bf16.mxu0 0
    %329 = vmatpush1.bf16.msra.mxu0 0
    %330 = vmatprep.subr.bf16.mxu0 0
    %331 = vmatpush1.bf16.msra.mxu0 0
    %332 = vmatprep.subr.bf16.mxu0 0
    %333 = vmatpush1.bf16.msra.mxu0 0
    %334 = vmatprep.subr.bf16.mxu0 0
    %335 = vmatpush1.bf16.msra.mxu0 0
    %336 = vmatprep.subr.bf16.mxu0 0
    %337 = vmatpush1.bf16.msra.mxu0 0
    %338 = vmatprep.subr.bf16.mxu0 0
    %339 = vmatpush1.bf16.msra.mxu0 0
    %340 = vmatprep.subr.bf16.mxu0 0
    %341 = vmatpush1.bf16.msra.mxu0 0
    %342 = vmatprep.subr.bf16.mxu0 0
    %343 = vmatpush1.bf16.msra.mxu0 0
    %344 = vmatprep.subr.bf16.mxu0 0
    %345 = vmatpush1.bf16.msra.mxu0 0
    %346 = vmatprep.subr.bf16.mxu0 0
    %347 = vmatpush1.bf16.msra.mxu0 0
    %348 = vmatprep.subr.bf16.mxu0 0
    %349 = vmatpush1.bf16.msra.mxu0 0
    %350 = vmatprep.mubr.bf16.mxu0 0
    %351 = vmatmul.mubr.bf16.gmra.mrb[0].mxu0 %v316
    %v352 = vpop.f32.mrb[0].mxu0
    %v353 = vadd.f32 %v299, %v352
    %v354 = vpop.f32.mrb[0].mxu0
    %v355 = vpop.f32.mrb[0].mxu0
    %v356 = vpop.f32.mrb[0].mxu0
    %357 = vdwg.mxu0
    %v362 = vunpack.c.l.b16 %v71
    %v363 = vunpack.c.l.b16 %v72
    %v364 = vunpack.c.l.b16 %v73
    %v365 = vunpack.c.l.b16 %v74
    %v366 = vpack.c.b16 %v363, %v362
    %v367 = vpack.c.b16 %v365, %v364
    %v371 = vsel %vm222, %v209, 0
    %373 = vmatprep.subr.bf16.mxu0 0
    %374 = vmatpush1.bf16.msra.mxu0 %v366
    %375 = vmatprep.subr.bf16.mxu0 0
    %376 = vmatpush1.bf16.msra.mxu0 %v367
    %377 = vmatprep.subr.bf16.mxu0 0
    %378 = vmatpush1.bf16.msra.mxu0 0
    %379 = vmatprep.subr.bf16.mxu0 0
    %380 = vmatpush1.bf16.msra.mxu0 0
    %381 = vmatprep.subr.bf16.mxu0 0
    %382 = vmatpush1.bf16.msra.mxu0 0
    %383 = vmatprep.subr.bf16.mxu0 0
    %384 = vmatpush1.bf16.msra.mxu0 0
    %385 = vmatprep.subr.bf16.mxu0 0
    %386 = vmatpush1.bf16.msra.mxu0 0
    %387 = vmatprep.subr.bf16.mxu0 0
    %388 = vmatpush1.bf16.msra.mxu0 0
    %389 = vmatprep.subr.bf16.mxu0 0
    %390 = vmatpush1.bf16.msra.mxu0 0
    %391 = vmatprep.subr.bf16.mxu0 0
    %392 = vmatpush1.bf16.msra.mxu0 0
    %393 = vmatprep.subr.bf16.mxu0 0
    %394 = vmatpush1.bf16.msra.mxu0 0
    %395 = vmatprep.subr.bf16.mxu0 0
    %396 = vmatpush1.bf16.msra.mxu0 0
    %397 = vmatprep.subr.bf16.mxu0 0
    %398 = vmatpush1.bf16.msra.mxu0 0
    %399 = vmatprep.subr.bf16.mxu0 0
    %400 = vmatpush1.bf16.msra.mxu0 0
    %401 = vmatprep.subr.bf16.mxu0 0
    %402 = vmatpush1.bf16.msra.mxu0 0
    %403 = vmatprep.subr.bf16.mxu0 0
    %404 = vmatpush1.bf16.msra.mxu0 0
    %405 = vmatprep.mubr.bf16.mxu0 0
    %406 = vmatmul.mubr.bf16.gmra.mrb[0].mxu0 %v371
    %v407 = vpop.f32.mrb[0].mxu0
    %v408 = vadd.f32 0.0, %v407
    %v409 = vpop.f32.mrb[0].mxu0
    %v410 = vpop.f32.mrb[0].mxu0
    %v411 = vpop.f32.mrb[0].mxu0
    %412 = vdwg.mxu0
    %v413 = vadd.f32 %v353, %v408
    %v414 = vxor.u32 %v413, 2147483648
    %v415 = vmul.f32 %v414, 1.442695
    %v416 = vpow.pop %v415
    %v417 = vadd.f32 %v416, 1.0
    %v418 = vrcp.pop %v417
    %v419 = vmul.f32 1.0, %v418
    %v420 = vtanh.pop %v413
    %422 = vrot.lane.b32.xlu0 %v80, 32
    %v423 = vpop.permute.xlu0 %422
    %v425 = vmul.f32 %v419, %v423
    %427 = vrot.lane.b32.xlu0 %v420, 64
    %v428 = vpop.permute.xlu0 %427
    %v430 = vmul.f32 %v419, %v428
    %432 = vrot.lane.b32.xlu0 %v430, 32
    %v433 = vpop.permute.xlu0 %432
    %v435 = vadd.f32 %v425, %v433
    %v436 = vtanh.pop %v435
    %438 = vrot.lane.b32.xlu0 %v436, 64
    %v439 = vpop.permute.xlu0 %438
    %v441 = vmul.f32 %v419, %v439
    %v442 = vpack.c.bf16 %v441, %v441
    %v443 = vlaneseq
    %v444 = vshrl.u32 %v443, 7
    %v445 = vsub.s32 0, %v444
    %v446 = vrot.slane %v76, %v445
    %448 = vrot.lane.b32.xlu0 %v446, 96
    %v449 = vpop.permute.xlu0 %448
    %v451 = vmul.f32 %v441, %v449
    %453 = vrot.lane.b32.xlu0 %v451, 32
    %v454 = vpop.permute.xlu0 %453
    %v456 = vsel %vm222, %v454, 0.0
    %457 = vadd.xlane.f32.xlu0 %v456
    %v458 = vpop.xlane.xlu0 %457
    %459 = vmatprep.subr.bf16.mxu0 0
    %460 = vmatpush1.bf16.msra.mxu0 %v218
    %461 = vmatprep.subr.bf16.mxu0 0
    %462 = vmatpush1.bf16.msra.mxu0 %v219
    %463 = vmatprep.subr.bf16.mxu0 0
    %464 = vmatpush1.bf16.msra.mxu0 0
    %465 = vmatprep.subr.bf16.mxu0 0
    %466 = vmatpush1.bf16.msra.mxu0 0
    %467 = vmatprep.subr.bf16.mxu0 0
    %468 = vmatpush1.bf16.msra.mxu0 0
    %469 = vmatprep.subr.bf16.mxu0 0
    %470 = vmatpush1.bf16.msra.mxu0 0
    %471 = vmatprep.subr.bf16.mxu0 0
    %472 = vmatpush1.bf16.msra.mxu0 0
    %473 = vmatprep.subr.bf16.mxu0 0
    %474 = vmatpush1.bf16.msra.mxu0 0
    %475 = vmatprep.subr.bf16.mxu0 0
    %476 = vmatpush1.bf16.msra.mxu0 0
    %477 = vmatprep.subr.bf16.mxu0 0
    %478 = vmatpush1.bf16.msra.mxu0 0
    %479 = vmatprep.subr.bf16.mxu0 0
    %480 = vmatpush1.bf16.msra.mxu0 0
    %481 = vmatprep.subr.bf16.mxu0 0
    %482 = vmatpush1.bf16.msra.mxu0 0
    %483 = vmatprep.subr.bf16.mxu0 0
    %484 = vmatpush1.bf16.msra.mxu0 0
    %485 = vmatprep.subr.bf16.mxu0 0
    %486 = vmatpush1.bf16.msra.mxu0 0
    %487 = vmatprep.subr.bf16.mxu0 0
    %488 = vmatpush1.bf16.msra.mxu0 0
    %489 = vmatprep.subr.bf16.mxu0 0
    %490 = vmatpush1.bf16.msra.mxu0 0
    %491 = vmatprep.mubr.bf16.mxu0 0
    %492 = vmatmul.mubr.bf16.gmra.mrb[0].mxu0 %v316
    %v493 = vpop.f32.mrb[0].mxu0
    %v494 = vadd.f32 0.0, %v493
    %v495 = vpop.f32.mrb[0].mxu0
    %v496 = vpop.f32.mrb[0].mxu0
    %v497 = vpop.f32.mrb[0].mxu0
    %498 = vdwg.mxu0
    %v499 = vadd.f32 %v181, %v494
    %v500 = vxor.u32 %v499, 2147483648
    %v501 = vmul.f32 %v500, 1.442695
    %v502 = vpow.pop %v501
    %v503 = vadd.f32 %v502, 1.0
    %v504 = vrcp.pop %v503
    %v505 = vmul.f32 1.0, %v504
    %v506 = vtanh.pop %v499
    %v507 = vmul.f32 %v505, %v288
    %509 = vrot.lane.b32.xlu0 %v506, 64
    %v510 = vpop.permute.xlu0 %509
    %v512 = vmul.f32 %v505, %v510
    %514 = vrot.lane.b32.xlu0 %v512, 32
    %v515 = vpop.permute.xlu0 %514
    %v517 = vadd.f32 %v507, %v515
    %v518 = vtanh.pop %v517
    %520 = vrot.lane.b32.xlu0 %v518, 64
    %v521 = vpop.permute.xlu0 %520
    %v523 = vmul.f32 %v505, %v521
    %v524 = vpack.c.bf16 %v523, %v523
    %526 = vrot.lane.b32.xlu0 %v524, 32
    %v527 = vpop.permute.xlu0 %526
    %v529 = vsel %vm222, %v527, 0
    %531 = vmatprep.subr.bf16.mxu0 0
    %532 = vmatpush1.bf16.msra.mxu0 %v311
    %533 = vmatprep.subr.bf16.mxu0 0
    %534 = vmatpush1.bf16.msra.mxu0 %v312
    %535 = vmatprep.subr.bf16.mxu0 0
    %536 = vmatpush1.bf16.msra.mxu0 0
    %537 = vmatprep.subr.bf16.mxu0 0
    %538 = vmatpush1.bf16.msra.mxu0 0
    %539 = vmatprep.subr.bf16.mxu0 0
    %540 = vmatpush1.bf16.msra.mxu0 0
    %541 = vmatprep.subr.bf16.mxu0 0
    %542 = vmatpush1.bf16.msra.mxu0 0
    %543 = vmatprep.subr.bf16.mxu0 0
    %544 = vmatpush1.bf16.msra.mxu0 0
    %545 = vmatprep.subr.bf16.mxu0 0
    %546 = vmatpush1.bf16.msra.mxu0 0
    %547 = vmatprep.subr.bf16.mxu0 0
    %548 = vmatpush1.bf16.msra.mxu0 0
    %549 = vmatprep.subr.bf16.mxu0 0
    %550 = vmatpush1.bf16.msra.mxu0 0
    %551 = vmatprep.subr.bf16.mxu0 0
    %552 = vmatpush1.bf16.msra.mxu0 0
    %553 = vmatprep.subr.bf16.mxu0 0
    %554 = vmatpush1.bf16.msra.mxu0 0
    %555 = vmatprep.subr.bf16.mxu0 0
    %556 = vmatpush1.bf16.msra.mxu0 0
    %557 = vmatprep.subr.bf16.mxu0 0
    %558 = vmatpush1.bf16.msra.mxu0 0
    %559 = vmatprep.subr.bf16.mxu0 0
    %560 = vmatpush1.bf16.msra.mxu0 0
    %561 = vmatprep.subr.bf16.mxu0 0
    %562 = vmatpush1.bf16.msra.mxu0 0
    %563 = vmatprep.mubr.bf16.mxu0 0
    %564 = vmatmul.mubr.bf16.gmra.mrb[0].mxu0 %v529
    %v565 = vpop.f32.mrb[0].mxu0
    %v566 = vadd.f32 %v299, %v565
    %v567 = vpop.f32.mrb[0].mxu0
    %v568 = vpop.f32.mrb[0].mxu0
    %v569 = vpop.f32.mrb[0].mxu0
    %570 = vdwg.mxu0
    %572 = vrot.lane.b32.xlu0 %v442, 32
    %v573 = vpop.permute.xlu0 %572
    %v575 = vsel %vm222, %v573, 0
    %577 = vmatprep.subr.bf16.mxu0 0
    %578 = vmatpush1.bf16.msra.mxu0 %v366
    %579 = vmatprep.subr.bf16.mxu0 0
    %580 = vmatpush1.bf16.msra.mxu0 %v367
    %581 = vmatprep.subr.bf16.mxu0 0
    %582 = vmatpush1.bf16.msra.mxu0 0
    %583 = vmatprep.subr.bf16.mxu0 0
    %584 = vmatpush1.bf16.msra.mxu0 0
    %585 = vmatprep.subr.bf16.mxu0 0
    %586 = vmatpush1.bf16.msra.mxu0 0
    %587 = vmatprep.subr.bf16.mxu0 0
    %588 = vmatpush1.bf16.msra.mxu0 0
    %589 = vmatprep.subr.bf16.mxu0 0
    %590 = vmatpush1.bf16.msra.mxu0 0
    %591 = vmatprep.subr.bf16.mxu0 0
    %592 = vmatpush1.bf16.msra.mxu0 0
    %593 = vmatprep.subr.bf16.mxu0 0
    %594 = vmatpush1.bf16.msra.mxu0 0
    %595 = vmatprep.subr.bf16.mxu0 0
    %596 = vmatpush1.bf16.msra.mxu0 0
    %597 = vmatprep.subr.bf16.mxu0 0
    %598 = vmatpush1.bf16.msra.mxu0 0
    %599 = vmatprep.subr.bf16.mxu0 0
    %600 = vmatpush1.bf16.msra.mxu0 0
    %601 = vmatprep.subr.bf16.mxu0 0
    %602 = vmatpush1.bf16.msra.mxu0 0
    %603 = vmatprep.subr.bf16.mxu0 0
    %604 = vmatpush1.bf16.msra.mxu0 0
    %605 = vmatprep.subr.bf16.mxu0 0
    %606 = vmatpush1.bf16.msra.mxu0 0
    %607 = vmatprep.subr.bf16.mxu0 0
    %608 = vmatpush1.bf16.msra.mxu0 0
    %609 = vmatprep.mubr.bf16.mxu0 0
    %610 = vmatmul.mubr.bf16.gmra.mrb[0].mxu0 %v575
    %v611 = vpop.f32.mrb[0].mxu0
    %v612 = vadd.f32 0.0, %v611
    %v613 = vpop.f32.mrb[0].mxu0
    %v614 = vpop.f32.mrb[0].mxu0
    %v615 = vpop.f32.mrb[0].mxu0
    %616 = vdwg.mxu0
    %v617 = vadd.f32 %v566, %v612
    %v618 = vxor.u32 %v617, 2147483648
    %v619 = vmul.f32 %v618, 1.442695
    %v620 = vpow.pop %v619
    %v621 = vadd.f32 %v620, 1.0
    %v622 = vrcp.pop %v621
    %v623 = vmul.f32 1.0, %v622
    %v624 = vtanh.pop %v617
    %v625 = vmul.f32 %v623, %v435
    %627 = vrot.lane.b32.xlu0 %v624, 64
    %v628 = vpop.permute.xlu0 %627
    %v630 = vmul.f32 %v623, %v628
    %632 = vrot.lane.b32.xlu0 %v630, 32
    %v633 = vpop.permute.xlu0 %632
    %v635 = vadd.f32 %v625, %v633
    %v636 = vtanh.pop %v635
    %638 = vrot.lane.b32.xlu0 %v636, 64
    %v639 = vpop.permute.xlu0 %638
    %v641 = vmul.f32 %v623, %v639
    %v642 = vpack.c.bf16 %v641, %v641
    %v643 = vmul.f32 %v641, %v449
    %645 = vrot.lane.b32.xlu0 %v643, 32
    %v646 = vpop.permute.xlu0 %645
    %v648 = vsel %vm222, %v646, 0.0
    %649 = vadd.xlane.f32.xlu0 %v648
    %v650 = vpop.xlane.xlu0 %649
    %651 = vmatprep.subr.bf16.mxu0 0
    %652 = vmatpush1.bf16.msra.mxu0 %v218
    %653 = vmatprep.subr.bf16.mxu0 0
    %654 = vmatpush1.bf16.msra.mxu0 %v219
    %655 = vmatprep.subr.bf16.mxu0 0
    %656 = vmatpush1.bf16.msra.mxu0 0
    %657 = vmatprep.subr.bf16.mxu0 0
    %658 = vmatpush1.bf16.msra.mxu0 0
    %659 = vmatprep.subr.bf16.mxu0 0
    %660 = vmatpush1.bf16.msra.mxu0 0
    %661 = vmatprep.subr.bf16.mxu0 0
    %662 = vmatpush1.bf16.msra.mxu0 0
    %663 = vmatprep.subr.bf16.mxu0 0
    %664 = vmatpush1.bf16.msra.mxu0 0
    %665 = vmatprep.subr.bf16.mxu0 0
    %666 = vmatpush1.bf16.msra.mxu0 0
    %667 = vmatprep.subr.bf16.mxu0 0
    %668 = vmatpush1.bf16.msra.mxu0 0
    %669 = vmatprep.subr.bf16.mxu0 0
    %670 = vmatpush1.bf16.msra.mxu0 0
    %671 = vmatprep.subr.bf16.mxu0 0
    %672 = vmatpush1.bf16.msra.mxu0 0
    %673 = vmatprep.subr.bf16.mxu0 0
    %674 = vmatpush1.bf16.msra.mxu0 0
    %675 = vmatprep.subr.bf16.mxu0 0
    %676 = vmatpush1.bf16.msra.mxu0 0
    %677 = vmatprep.subr.bf16.mxu0 0
    %678 = vmatpush1.bf16.msra.mxu0 0
    %679 = vmatprep.subr.bf16.mxu0 0
    %680 = vmatpush1.bf16.msra.mxu0 0
    %681 = vmatprep.subr.bf16.mxu0 0
    %682 = vmatpush1.bf16.msra.mxu0 0
    %683 = vmatprep.mubr.bf16.mxu0 0
    %684 = vmatmul.mubr.bf16.gmra.mrb[0].mxu0 %v529
    %v685 = vpop.f32.mrb[0].mxu0
    %v686 = vadd.f32 0.0, %v685
    %v687 = vpop.f32.mrb[0].mxu0
    %v688 = vpop.f32.mrb[0].mxu0
    %v689 = vpop.f32.mrb[0].mxu0
    %690 = vdwg.mxu0
    %v691 = vadd.f32 %v186, %v686
    %v692 = vxor.u32 %v691, 2147483648
    %v693 = vmul.f32 %v692, 1.442695
    %v694 = vpow.pop %v693
    %v695 = vadd.f32 %v694, 1.0
    %v696 = vrcp.pop %v695
    %v697 = vmul.f32 1.0, %v696
    %v698 = vtanh.pop %v691
    %v699 = vmul.f32 %v697, %v517
    %701 = vrot.lane.b32.xlu0 %v698, 64
    %v702 = vpop.permute.xlu0 %701
    %v704 = vmul.f32 %v697, %v702
    %706 = vrot.lane.b32.xlu0 %v704, 32
    %v707 = vpop.permute.xlu0 %706
    %v709 = vadd.f32 %v699, %v707
    %v710 = vtanh.pop %v709
    %712 = vrot.lane.b32.xlu0 %v710, 64
    %v713 = vpop.permute.xlu0 %712
    %v715 = vmul.f32 %v697, %v713
    %v716 = vpack.c.bf16 %v715, %v715
    %718 = vrot.lane.b32.xlu0 %v716, 32
    %v719 = vpop.permute.xlu0 %718
    %v721 = vsel %vm222, %v719, 0
    %723 = vmatprep.subr.bf16.mxu0 0
    %724 = vmatpush1.bf16.msra.mxu0 %v311
    %725 = vmatprep.subr.bf16.mxu0 0
    %726 = vmatpush1.bf16.msra.mxu0 %v312
    %727 = vmatprep.subr.bf16.mxu0 0
    %728 = vmatpush1.bf16.msra.mxu0 0
    %729 = vmatprep.subr.bf16.mxu0 0
    %730 = vmatpush1.bf16.msra.mxu0 0
    %731 = vmatprep.subr.bf16.mxu0 0
    %732 = vmatpush1.bf16.msra.mxu0 0
    %733 = vmatprep.subr.bf16.mxu0 0
    %734 = vmatpush1.bf16.msra.mxu0 0
    %735 = vmatprep.subr.bf16.mxu0 0
    %736 = vmatpush1.bf16.msra.mxu0 0
    %737 = vmatprep.subr.bf16.mxu0 0
    %738 = vmatpush1.bf16.msra.mxu0 0
    %739 = vmatprep.subr.bf16.mxu0 0
    %740 = vmatpush1.bf16.msra.mxu0 0
    %741 = vmatprep.subr.bf16.mxu0 0
    %742 = vmatpush1.bf16.msra.mxu0 0
    %743 = vmatprep.subr.bf16.mxu0 0
    %744 = vmatpush1.bf16.msra.mxu0 0
    %745 = vmatprep.subr.bf16.mxu0 0
    %746 = vmatpush1.bf16.msra.mxu0 0
    %747 = vmatprep.subr.bf16.mxu0 0
    %748 = vmatpush1.bf16.msra.mxu0 0
    %749 = vmatprep.subr.bf16.mxu0 0
    %750 = vmatpush1.bf16.msra.mxu0 0
    %751 = vmatprep.subr.bf16.mxu0 0
    %752 = vmatpush1.bf16.msra.mxu0 0
    %753 = vmatprep.subr.bf16.mxu0 0
    %754 = vmatpush1.bf16.msra.mxu0 0
    %755 = vmatprep.mubr.bf16.mxu0 0
    %756 = vmatmul.mubr.bf16.gmra.mrb[0].mxu0 %v721
    %v757 = vpop.f32.mrb[0].mxu0
    %v758 = vadd.f32 %v299, %v757
    %v759 = vpop.f32.mrb[0].mxu0
    %v760 = vpop.f32.mrb[0].mxu0
    %v761 = vpop.f32.mrb[0].mxu0
    %762 = vdwg.mxu0
    %764 = vrot.lane.b32.xlu0 %v642, 32
    %v765 = vpop.permute.xlu0 %764
    %v767 = vsel %vm222, %v765, 0
    %769 = vmatprep.subr.bf16.mxu0 0
    %770 = vmatpush1.bf16.msra.mxu0 %v366
    %771 = vmatprep.subr.bf16.mxu0 0
    %772 = vmatpush1.bf16.msra.mxu0 %v367
    %773 = vmatprep.subr.bf16.mxu0 0
    %774 = vmatpush1.bf16.msra.mxu0 0
    %775 = vmatprep.subr.bf16.mxu0 0
    %776 = vmatpush1.bf16.msra.mxu0 0
    %777 = vmatprep.subr.bf16.mxu0 0
    %778 = vmatpush1.bf16.msra.mxu0 0
    %779 = vmatprep.subr.bf16.mxu0 0
    %780 = vmatpush1.bf16.msra.mxu0 0
    %781 = vmatprep.subr.bf16.mxu0 0
    %782 = vmatpush1.bf16.msra.mxu0 0
    %783 = vmatprep.subr.bf16.mxu0 0
    %784 = vmatpush1.bf16.msra.mxu0 0
    %785 = vmatprep.subr.bf16.mxu0 0
    %786 = vmatpush1.bf16.msra.mxu0 0
    %787 = vmatprep.subr.bf16.mxu0 0
    %788 = vmatpush1.bf16.msra.mxu0 0
    %789 = vmatprep.subr.bf16.mxu0 0
    %790 = vmatpush1.bf16.msra.mxu0 0
    %791 = vmatprep.subr.bf16.mxu0 0
    %792 = vmatpush1.bf16.msra.mxu0 0
    %793 = vmatprep.subr.bf16.mxu0 0
    %794 = vmatpush1.bf16.msra.mxu0 0
    %795 = vmatprep.subr.bf16.mxu0 0
    %796 = vmatpush1.bf16.msra.mxu0 0
    %797 = vmatprep.subr.bf16.mxu0 0
    %798 = vmatpush1.bf16.msra.mxu0 0
    %799 = vmatprep.subr.bf16.mxu0 0
    %800 = vmatpush1.bf16.msra.mxu0 0
    %801 = vmatprep.mubr.bf16.mxu0 0
    %802 = vmatmul.mubr.bf16.gmra.mrb[0].mxu0 %v767
    %v803 = vpop.f32.mrb[0].mxu0
    %v804 = vadd.f32 0.0, %v803
    %v805 = vpop.f32.mrb[0].mxu0
    %v806 = vpop.f32.mrb[0].mxu0
    %v807 = vpop.f32.mrb[0].mxu0
    %808 = vdwg.mxu0
    %v809 = vadd.f32 %v758, %v804
    %v810 = vxor.u32 %v809, 2147483648
    %v811 = vmul.f32 %v810, 1.442695
    %v812 = vpow.pop %v811
    %v813 = vadd.f32 %v812, 1.0
    %v814 = vrcp.pop %v813
    %v815 = vmul.f32 1.0, %v814
    %v816 = vtanh.pop %v809
    %v817 = vmul.f32 %v815, %v635
    %819 = vrot.lane.b32.xlu0 %v816, 64
    %v820 = vpop.permute.xlu0 %819
    %v822 = vmul.f32 %v815, %v820
    %824 = vrot.lane.b32.xlu0 %v822, 32
    %v825 = vpop.permute.xlu0 %824
    %v827 = vadd.f32 %v817, %v825
    %v828 = vtanh.pop %v827
    %830 = vrot.lane.b32.xlu0 %v828, 64
    %v831 = vpop.permute.xlu0 %830
    %v833 = vmul.f32 %v815, %v831
    %v834 = vpack.c.bf16 %v833, %v833
    %v835 = vmul.f32 %v833, %v449
    %837 = vrot.lane.b32.xlu0 %v835, 32
    %v838 = vpop.permute.xlu0 %837
    %v840 = vsel %vm222, %v838, 0.0
    %841 = vadd.xlane.f32.xlu0 %v840
    %v842 = vpop.xlane.xlu0 %841
    %843 = vmatprep.subr.bf16.mxu0 0
    %844 = vmatpush1.bf16.msra.mxu0 %v218
    %845 = vmatprep.subr.bf16.mxu0 0
    %846 = vmatpush1.bf16.msra.mxu0 %v219
    %847 = vmatprep.subr.bf16.mxu0 0
    %848 = vmatpush1.bf16.msra.mxu0 0
    %849 = vmatprep.subr.bf16.mxu0 0
    %850 = vmatpush1.bf16.msra.mxu0 0
    %851 = vmatprep.subr.bf16.mxu0 0
    %852 = vmatpush1.bf16.msra.mxu0 0
    %853 = vmatprep.subr.bf16.mxu0 0
    %854 = vmatpush1.bf16.msra.mxu0 0
    %855 = vmatprep.subr.bf16.mxu0 0
    %856 = vmatpush1.bf16.msra.mxu0 0
    %857 = vmatprep.subr.bf16.mxu0 0
    %858 = vmatpush1.bf16.msra.mxu0 0
    %859 = vmatprep.subr.bf16.mxu0 0
    %860 = vmatpush1.bf16.msra.mxu0 0
    %861 = vmatprep.subr.bf16.mxu0 0
    %862 = vmatpush1.bf16.msra.mxu0 0
    %863 = vmatprep.subr.bf16.mxu0 0
    %864 = vmatpush1.bf16.msra.mxu0 0
    %865 = vmatprep.subr.bf16.mxu0 0
    %866 = vmatpush1.bf16.msra.mxu0 0
    %867 = vmatprep.subr.bf16.mxu0 0
    %868 = vmatpush1.bf16.msra.mxu0 0
    %869 = vmatprep.subr.bf16.mxu0 0
    %870 = vmatpush1.bf16.msra.mxu0 0
    %871 = vmatprep.subr.bf16.mxu0 0
    %872 = vmatpush1.bf16.msra.mxu0 0
    %873 = vmatprep.subr.bf16.mxu0 0
    %874 = vmatpush1.bf16.msra.mxu0 0
    %875 = vmatprep.mubr.bf16.mxu0 0
    %876 = vmatmul.mubr.bf16.gmra.mrb[0].mxu0 %v721
    %v877 = vpop.f32.mrb[0].mxu0
    %v878 = vadd.f32 0.0, %v877
    %v879 = vpop.f32.mrb[0].mxu0
    %v880 = vpop.f32.mrb[0].mxu0
    %v881 = vpop.f32.mrb[0].mxu0
    %882 = vdwg.mxu0
    %v883 = vadd.f32 %v189, %v878
    %v884 = vxor.u32 %v883, 2147483648
    %v885 = vmul.f32 %v884, 1.442695
    %v886 = vpow.pop %v885
    %v887 = vadd.f32 %v886, 1.0
    %v888 = vrcp.pop %v887
    %v889 = vmul.f32 1.0, %v888
    %v890 = vtanh.pop %v883
    %v891 = vmul.f32 %v889, %v709
    %893 = vrot.lane.b32.xlu0 %v890, 64
    %v894 = vpop.permute.xlu0 %893
    %v896 = vmul.f32 %v889, %v894
    %898 = vrot.lane.b32.xlu0 %v896, 32
    %v899 = vpop.permute.xlu0 %898
    %v901 = vadd.f32 %v891, %v899
    %v902 = vtanh.pop %v901
    %904 = vrot.lane.b32.xlu0 %v902, 64
    %v905 = vpop.permute.xlu0 %904
    %v907 = vmul.f32 %v889, %v905
    %v908 = vpack.c.bf16 %v907, %v907
    %910 = vrot.lane.b32.xlu0 %v908, 32
    %v911 = vpop.permute.xlu0 %910
    %v913 = vsel %vm222, %v911, 0
    %915 = vmatprep.subr.bf16.mxu0 0
    %916 = vmatpush1.bf16.msra.mxu0 %v311
    %917 = vmatprep.subr.bf16.mxu0 0
    %918 = vmatpush1.bf16.msra.mxu0 %v312
    %919 = vmatprep.subr.bf16.mxu0 0
    %920 = vmatpush1.bf16.msra.mxu0 0
    %921 = vmatprep.subr.bf16.mxu0 0
    %922 = vmatpush1.bf16.msra.mxu0 0
    %923 = vmatprep.subr.bf16.mxu0 0
    %924 = vmatpush1.bf16.msra.mxu0 0
    %925 = vmatprep.subr.bf16.mxu0 0
    %926 = vmatpush1.bf16.msra.mxu0 0
    %927 = vmatprep.subr.bf16.mxu0 0
    %928 = vmatpush1.bf16.msra.mxu0 0
    %929 = vmatprep.subr.bf16.mxu0 0
    %930 = vmatpush1.bf16.msra.mxu0 0
    %931 = vmatprep.subr.bf16.mxu0 0
    %932 = vmatpush1.bf16.msra.mxu0 0
    %933 = vmatprep.subr.bf16.mxu0 0
    %934 = vmatpush1.bf16.msra.mxu0 0
    %935 = vmatprep.subr.bf16.mxu0 0
    %936 = vmatpush1.bf16.msra.mxu0 0
    %937 = vmatprep.subr.bf16.mxu0 0
    %938 = vmatpush1.bf16.msra.mxu0 0
    %939 = vmatprep.subr.bf16.mxu0 0
    %940 = vmatpush1.bf16.msra.mxu0 0
    %941 = vmatprep.subr.bf16.mxu0 0
    %942 = vmatpush1.bf16.msra.mxu0 0
    %943 = vmatprep.subr.bf16.mxu0 0
    %944 = vmatpush1.bf16.msra.mxu0 0
    %945 = vmatprep.subr.bf16.mxu0 0
    %946 = vmatpush1.bf16.msra.mxu0 0
    %947 = vmatprep.mubr.bf16.mxu0 0
    %948 = vmatmul.mubr.bf16.gmra.mrb[0].mxu0 %v913
    %v949 = vpop.f32.mrb[0].mxu0
    %v950 = vadd.f32 %v299, %v949
    %v951 = vpop.f32.mrb[0].mxu0
    %v952 = vpop.f32.mrb[0].mxu0
    %v953 = vpop.f32.mrb[0].mxu0
    %954 = vdwg.mxu0
    %956 = vrot.lane.b32.xlu0 %v834, 32
    %v957 = vpop.permute.xlu0 %956
    %v959 = vsel %vm222, %v957, 0
    %961 = vmatprep.subr.bf16.mxu0 0
    %962 = vmatpush1.bf16.msra.mxu0 %v366
    %963 = vmatprep.subr.bf16.mxu0 0
    %964 = vmatpush1.bf16.msra.mxu0 %v367
    %965 = vmatprep.subr.bf16.mxu0 0
    %966 = vmatpush1.bf16.msra.mxu0 0
    %967 = vmatprep.subr.bf16.mxu0 0
    %968 = vmatpush1.bf16.msra.mxu0 0
    %969 = vmatprep.subr.bf16.mxu0 0
    %970 = vmatpush1.bf16.msra.mxu0 0
    %971 = vmatprep.subr.bf16.mxu0 0
    %972 = vmatpush1.bf16.msra.mxu0 0
    %973 = vmatprep.subr.bf16.mxu0 0
    %974 = vmatpush1.bf16.msra.mxu0 0
    %975 = vmatprep.subr.bf16.mxu0 0
    %976 = vmatpush1.bf16.msra.mxu0 0
    %977 = vmatprep.subr.bf16.mxu0 0
    %978 = vmatpush1.bf16.msra.mxu0 0
    %979 = vmatprep.subr.bf16.mxu0 0
    %980 = vmatpush1.bf16.msra.mxu0 0
    %981 = vmatprep.subr.bf16.mxu0 0
    %982 = vmatpush1.bf16.msra.mxu0 0
    %983 = vmatprep.subr.bf16.mxu0 0
    %984 = vmatpush1.bf16.msra.mxu0 0
    %985 = vmatprep.subr.bf16.mxu0 0
    %986 = vmatpush1.bf16.msra.mxu0 0
    %987 = vmatprep.subr.bf16.mxu0 0
    %988 = vmatpush1.bf16.msra.mxu0 0
    %989 = vmatprep.subr.bf16.mxu0 0
    %990 = vmatpush1.bf16.msra.mxu0 0
    %991 = vmatprep.subr.bf16.mxu0 0
    %992 = vmatpush1.bf16.msra.mxu0 0
    %993 = vmatprep.mubr.bf16.mxu0 0
    %994 = vmatmul.mubr.bf16.gmra.mrb[0].mxu0 %v959
    %v995 = vpop.f32.mrb[0].mxu0
    %v996 = vadd.f32 0.0, %v995
    %v997 = vpop.f32.mrb[0].mxu0
    %v998 = vpop.f32.mrb[0].mxu0
    %v999 = vpop.f32.mrb[0].mxu0
    %1000 = vdwg.mxu0
    %v1001 = vadd.f32 %v950, %v996
    %v1002 = vxor.u32 %v1001, 2147483648
    %v1003 = vmul.f32 %v1002, 1.442695
    %v1004 = vpow.pop %v1003
    %v1005 = vadd.f32 %v1004, 1.0
    %v1006 = vrcp.pop %v1005
    %v1007 = vmul.f32 1.0, %v1006
    %v1008 = vtanh.pop %v1001
    %v1009 = vmul.f32 %v1007, %v827
    %1011 = vrot.lane.b32.xlu0 %v1008, 64
    %v1012 = vpop.permute.xlu0 %1011
    %v1014 = vmul.f32 %v1007, %v1012
    %1016 = vrot.lane.b32.xlu0 %v1014, 32
    %v1017 = vpop.permute.xlu0 %1016
    %v1019 = vadd.f32 %v1009, %v1017
    %v1020 = vtanh.pop %v1019
    %1022 = vrot.lane.b32.xlu0 %v1020, 64
    %v1023 = vpop.permute.xlu0 %1022
    %v1025 = vmul.f32 %v1007, %v1023
    %v1026 = vpack.c.bf16 %v1025, %v1025
    %v1027 = vmul.f32 %v1025, %v449
    %1029 = vrot.lane.b32.xlu0 %v1027, 32
    %v1030 = vpop.permute.xlu0 %1029
    %v1032 = vsel %vm222, %v1030, 0.0
    %1033 = vadd.xlane.f32.xlu0 %v1032
    %v1034 = vpop.xlane.xlu0 %1033
    %1035 = vmatprep.subr.bf16.mxu0 0
    %1036 = vmatpush1.bf16.msra.mxu0 %v218
    %1037 = vmatprep.subr.bf16.mxu0 0
    %1038 = vmatpush1.bf16.msra.mxu0 %v219
    %1039 = vmatprep.subr.bf16.mxu0 0
    %1040 = vmatpush1.bf16.msra.mxu0 0
    %1041 = vmatprep.subr.bf16.mxu0 0
    %1042 = vmatpush1.bf16.msra.mxu0 0
    %1043 = vmatprep.subr.bf16.mxu0 0
    %1044 = vmatpush1.bf16.msra.mxu0 0
    %1045 = vmatprep.subr.bf16.mxu0 0
    %1046 = vmatpush1.bf16.msra.mxu0 0
    %1047 = vmatprep.subr.bf16.mxu0 0
    %1048 = vmatpush1.bf16.msra.mxu0 0
    %1049 = vmatprep.subr.bf16.mxu0 0
    %1050 = vmatpush1.bf16.msra.mxu0 0
    %1051 = vmatprep.subr.bf16.mxu0 0
    %1052 = vmatpush1.bf16.msra.mxu0 0
    %1053 = vmatprep.subr.bf16.mxu0 0
    %1054 = vmatpush1.bf16.msra.mxu0 0
    %1055 = vmatprep.subr.bf16.mxu0 0
    %1056 = vmatpush1.bf16.msra.mxu0 0
    %1057 = vmatprep.subr.bf16.mxu0 0
    %1058 = vmatpush1.bf16.msra.mxu0 0
    %1059 = vmatprep.subr.bf16.mxu0 0
    %1060 = vmatpush1.bf16.msra.mxu0 0
    %1061 = vmatprep.subr.bf16.mxu0 0
    %1062 = vmatpush1.bf16.msra.mxu0 0
    %1063 = vmatprep.subr.bf16.mxu0 0
    %1064 = vmatpush1.bf16.msra.mxu0 0
    %1065 = vmatprep.subr.bf16.mxu0 0
    %1066 = vmatpush1.bf16.msra.mxu0 0
    %1067 = vmatprep.mubr.bf16.mxu0 0
    %1068 = vmatmul.mubr.bf16.gmra.mrb[0].mxu0 %v913
    %v1069 = vpop.f32.mrb[0].mxu0
    %v1070 = vadd.f32 0.0, %v1069
    %v1071 = vpop.f32.mrb[0].mxu0
    %v1072 = vpop.f32.mrb[0].mxu0
    %v1073 = vpop.f32.mrb[0].mxu0
    %1074 = vdwg.mxu0
    %v1075 = vadd.f32 %v194, %v1070
    %v1076 = vxor.u32 %v1075, 2147483648
    %v1077 = vmul.f32 %v1076, 1.442695
    %v1078 = vpow.pop %v1077
    %v1079 = vadd.f32 %v1078, 1.0
    %v1080 = vrcp.pop %v1079
    %v1081 = vmul.f32 1.0, %v1080
    %v1082 = vtanh.pop %v1075
    %v1083 = vmul.f32 %v1081, %v901
    %1085 = vrot.lane.b32.xlu0 %v1082, 64
    %v1086 = vpop.permute.xlu0 %1085
    %v1088 = vmul.f32 %v1081, %v1086
    %1090 = vrot.lane.b32.xlu0 %v1088, 32
    %v1091 = vpop.permute.xlu0 %1090
    %v1093 = vadd.f32 %v1083, %v1091
    %v1094 = vtanh.pop %v1093
    %1096 = vrot.lane.b32.xlu0 %v1094, 64
    %v1097 = vpop.permute.xlu0 %1096
    %v1099 = vmul.f32 %v1081, %v1097
    %v1100 = vpack.c.bf16 %v1099, %v1099
    %1102 = vrot.lane.b32.xlu0 %v1100, 32
    %v1103 = vpop.permute.xlu0 %1102
    %v1105 = vsel %vm222, %v1103, 0
    %1107 = vmatprep.subr.bf16.mxu0 0
    %1108 = vmatpush1.bf16.msra.mxu0 %v311
    %1109 = vmatprep.subr.bf16.mxu0 0
    %1110 = vmatpush1.bf16.msra.mxu0 %v312
    %1111 = vmatprep.subr.bf16.mxu0 0
    %1112 = vmatpush1.bf16.msra.mxu0 0
    %1113 = vmatprep.subr.bf16.mxu0 0
    %1114 = vmatpush1.bf16.msra.mxu0 0
    %1115 = vmatprep.subr.bf16.mxu0 0
    %1116 = vmatpush1.bf16.msra.mxu0 0
    %1117 = vmatprep.subr.bf16.mxu0 0
    %1118 = vmatpush1.bf16.msra.mxu0 0
    %1119 = vmatprep.subr.bf16.mxu0 0
    %1120 = vmatpush1.bf16.msra.mxu0 0
    %1121 = vmatprep.subr.bf16.mxu0 0
    %1122 = vmatpush1.bf16.msra.mxu0 0
    %1123 = vmatprep.subr.bf16.mxu0 0
    %1124 = vmatpush1.bf16.msra.mxu0 0
    %1125 = vmatprep.subr.bf16.mxu0 0
    %1126 = vmatpush1.bf16.msra.mxu0 0
    %1127 = vmatprep.subr.bf16.mxu0 0
    %1128 = vmatpush1.bf16.msra.mxu0 0
    %1129 = vmatprep.subr.bf16.mxu0 0
    %1130 = vmatpush1.bf16.msra.mxu0 0
    %1131 = vmatprep.subr.bf16.mxu0 0
    %1132 = vmatpush1.bf16.msra.mxu0 0
    %1133 = vmatprep.subr.bf16.mxu0 0
    %1134 = vmatpush1.bf16.msra.mxu0 0
    %1135 = vmatprep.subr.bf16.mxu0 0
    %1136 = vmatpush1.bf16.msra.mxu0 0
    %1137 = vmatprep.subr.bf16.mxu0 0
    %1138 = vmatpush1.bf16.msra.mxu0 0
    %1139 = vmatprep.mubr.bf16.mxu0 0
    %1140 = vmatmul.mubr.bf16.gmra.mrb[0].mxu0 %v1105
    %v1141 = vpop.f32.mrb[0].mxu0
    %v1142 = vadd.f32 %v299, %v1141
    %v1143 = vpop.f32.mrb[0].mxu0
    %v1144 = vpop.f32.mrb[0].mxu0
    %v1145 = vpop.f32.mrb[0].mxu0
    %1146 = vdwg.mxu0
    %1148 = vrot.lane.b32.xlu0 %v1026, 32
    %v1149 = vpop.permute.xlu0 %1148
    %v1151 = vsel %vm222, %v1149, 0
    %1153 = vmatprep.subr.bf16.mxu0 0
    %1154 = vmatpush1.bf16.msra.mxu0 %v366
    %1155 = vmatprep.subr.bf16.mxu0 0
    %1156 = vmatpush1.bf16.msra.mxu0 %v367
    %1157 = vmatprep.subr.bf16.mxu0 0
    %1158 = vmatpush1.bf16.msra.mxu0 0
    %1159 = vmatprep.subr.bf16.mxu0 0
    %1160 = vmatpush1.bf16.msra.mxu0 0
    %1161 = vmatprep.subr.bf16.mxu0 0
    %1162 = vmatpush1.bf16.msra.mxu0 0
    %1163 = vmatprep.subr.bf16.mxu0 0
    %1164 = vmatpush1.bf16.msra.mxu0 0
    %1165 = vmatprep.subr.bf16.mxu0 0
    %1166 = vmatpush1.bf16.msra.mxu0 0
    %1167 = vmatprep.subr.bf16.mxu0 0
    %1168 = vmatpush1.bf16.msra.mxu0 0
    %1169 = vmatprep.subr.bf16.mxu0 0
    %1170 = vmatpush1.bf16.msra.mxu0 0
    %1171 = vmatprep.subr.bf16.mxu0 0
    %1172 = vmatpush1.bf16.msra.mxu0 0
    %1173 = vmatprep.subr.bf16.mxu0 0
    %1174 = vmatpush1.bf16.msra.mxu0 0
    %1175 = vmatprep.subr.bf16.mxu0 0
    %1176 = vmatpush1.bf16.msra.mxu0 0
    %1177 = vmatprep.subr.bf16.mxu0 0
    %1178 = vmatpush1.bf16.msra.mxu0 0
    %1179 = vmatprep.subr.bf16.mxu0 0
    %1180 = vmatpush1.bf16.msra.mxu0 0
    %1181 = vmatprep.subr.bf16.mxu0 0
    %1182 = vmatpush1.bf16.msra.mxu0 0
    %1183 = vmatprep.subr.bf16.mxu0 0
    %1184 = vmatpush1.bf16.msra.mxu0 0
    %1185 = vmatprep.mubr.bf16.mxu0 0
    %1186 = vmatmul.mubr.bf16.gmra.mrb[0].mxu0 %v1151
    %v1187 = vpop.f32.mrb[0].mxu0
    %v1188 = vadd.f32 0.0, %v1187
    %v1189 = vpop.f32.mrb[0].mxu0
    %v1190 = vpop.f32.mrb[0].mxu0
    %v1191 = vpop.f32.mrb[0].mxu0
    %1192 = vdwg.mxu0
    %v1193 = vadd.f32 %v1142, %v1188
    %v1194 = vxor.u32 %v1193, 2147483648
    %v1195 = vmul.f32 %v1194, 1.442695
    %v1196 = vpow.pop %v1195
    %v1197 = vadd.f32 %v1196, 1.0
    %v1198 = vrcp.pop %v1197
    %v1199 = vmul.f32 1.0, %v1198
    %v1200 = vtanh.pop %v1193
    %v1201 = vmul.f32 %v1199, %v1019
    %1203 = vrot.lane.b32.xlu0 %v1200, 64
    %v1204 = vpop.permute.xlu0 %1203
    %v1206 = vmul.f32 %v1199, %v1204
    %1208 = vrot.lane.b32.xlu0 %v1206, 32
    %v1209 = vpop.permute.xlu0 %1208
    %v1211 = vadd.f32 %v1201, %v1209
    %v1212 = vtanh.pop %v1211
    %1214 = vrot.lane.b32.xlu0 %v1212, 64
    %v1215 = vpop.permute.xlu0 %1214
    %v1217 = vmul.f32 %v1199, %v1215
    %v1218 = vpack.c.bf16 %v1217, %v1217
    %v1219 = vmul.f32 %v1217, %v449
    %1221 = vrot.lane.b32.xlu0 %v1219, 32
    %v1222 = vpop.permute.xlu0 %1221
    %v1224 = vsel %vm222, %v1222, 0.0
    %1225 = vadd.xlane.f32.xlu0 %v1224
    %v1226 = vpop.xlane.xlu0 %1225
    %1227 = vmatprep.subr.bf16.mxu0 0
    %1228 = vmatpush1.bf16.msra.mxu0 %v218
    %1229 = vmatprep.subr.bf16.mxu0 0
    %1230 = vmatpush1.bf16.msra.mxu0 %v219
    %1231 = vmatprep.subr.bf16.mxu0 0
    %1232 = vmatpush1.bf16.msra.mxu0 0
    %1233 = vmatprep.subr.bf16.mxu0 0
    %1234 = vmatpush1.bf16.msra.mxu0 0
    %1235 = vmatprep.subr.bf16.mxu0 0
    %1236 = vmatpush1.bf16.msra.mxu0 0
    %1237 = vmatprep.subr.bf16.mxu0 0
    %1238 = vmatpush1.bf16.msra.mxu0 0
    %1239 = vmatprep.subr.bf16.mxu0 0
    %1240 = vmatpush1.bf16.msra.mxu0 0
    %1241 = vmatprep.subr.bf16.mxu0 0
    %1242 = vmatpush1.bf16.msra.mxu0 0
    %1243 = vmatprep.subr.bf16.mxu0 0
    %1244 = vmatpush1.bf16.msra.mxu0 0
    %1245 = vmatprep.subr.bf16.mxu0 0
    %1246 = vmatpush1.bf16.msra.mxu0 0
    %1247 = vmatprep.subr.bf16.mxu0 0
    %1248 = vmatpush1.bf16.msra.mxu0 0
    %1249 = vmatprep.subr.bf16.mxu0 0
    %1250 = vmatpush1.bf16.msra.mxu0 0
    %1251 = vmatprep.subr.bf16.mxu0 0
    %1252 = vmatpush1.bf16.msra.mxu0 0
    %1253 = vmatprep.subr.bf16.mxu0 0
    %1254 = vmatpush1.bf16.msra.mxu0 0
    %1255 = vmatprep.subr.bf16.mxu0 0
    %1256 = vmatpush1.bf16.msra.mxu0 0
    %1257 = vmatprep.subr.bf16.mxu0 0
    %1258 = vmatpush1.bf16.msra.mxu0 0
    %1259 = vmatprep.mubr.bf16.mxu0 0
    %1260 = vmatmul.mubr.bf16.gmra.mrb[0].mxu0 %v1105
    %v1261 = vpop.f32.mrb[0].mxu0
    %v1262 = vadd.f32 0.0, %v1261
    %v1263 = vpop.f32.mrb[0].mxu0
    %v1264 = vpop.f32.mrb[0].mxu0
    %v1265 = vpop.f32.mrb[0].mxu0
    %1266 = vdwg.mxu0
    %v1267 = vadd.f32 %v197, %v1262
    %v1268 = vxor.u32 %v1267, 2147483648
    %v1269 = vmul.f32 %v1268, 1.442695
    %v1270 = vpow.pop %v1269
    %v1271 = vadd.f32 %v1270, 1.0
    %v1272 = vrcp.pop %v1271
    %v1273 = vmul.f32 1.0, %v1272
    %v1274 = vtanh.pop %v1267
    %v1275 = vmul.f32 %v1273, %v1093
    %1277 = vrot.lane.b32.xlu0 %v1274, 64
    %v1278 = vpop.permute.xlu0 %1277
    %v1280 = vmul.f32 %v1273, %v1278
    %1282 = vrot.lane.b32.xlu0 %v1280, 32
    %v1283 = vpop.permute.xlu0 %1282
    %v1285 = vadd.f32 %v1275, %v1283
    %v1286 = vtanh.pop %v1285
    %1288 = vrot.lane.b32.xlu0 %v1286, 64
    %v1289 = vpop.permute.xlu0 %1288
    %v1291 = vmul.f32 %v1273, %v1289
    %v1292 = vpack.c.bf16 %v1291, %v1291
    %1294 = vrot.lane.b32.xlu0 %v1292, 32
    %v1295 = vpop.permute.xlu0 %1294
    %v1297 = vsel %vm222, %v1295, 0
    %1299 = vmatprep.subr.bf16.mxu0 0
    %1300 = vmatpush1.bf16.msra.mxu0 %v311
    %1301 = vmatprep.subr.bf16.mxu0 0
    %1302 = vmatpush1.bf16.msra.mxu0 %v312
    %1303 = vmatprep.subr.bf16.mxu0 0
    %1304 = vmatpush1.bf16.msra.mxu0 0
    %1305 = vmatprep.subr.bf16.mxu0 0
    %1306 = vmatpush1.bf16.msra.mxu0 0
    %1307 = vmatprep.subr.bf16.mxu0 0
    %1308 = vmatpush1.bf16.msra.mxu0 0
    %1309 = vmatprep.subr.bf16.mxu0 0
    %1310 = vmatpush1.bf16.msra.mxu0 0
    %1311 = vmatprep.subr.bf16.mxu0 0
    %1312 = vmatpush1.bf16.msra.mxu0 0
    %1313 = vmatprep.subr.bf16.mxu0 0
    %1314 = vmatpush1.bf16.msra.mxu0 0
    %1315 = vmatprep.subr.bf16.mxu0 0
    %1316 = vmatpush1.bf16.msra.mxu0 0
    %1317 = vmatprep.subr.bf16.mxu0 0
    %1318 = vmatpush1.bf16.msra.mxu0 0
    %1319 = vmatprep.subr.bf16.mxu0 0
    %1320 = vmatpush1.bf16.msra.mxu0 0
    %1321 = vmatprep.subr.bf16.mxu0 0
    %1322 = vmatpush1.bf16.msra.mxu0 0
    %1323 = vmatprep.subr.bf16.mxu0 0
    %1324 = vmatpush1.bf16.msra.mxu0 0
    %1325 = vmatprep.subr.bf16.mxu0 0
    %1326 = vmatpush1.bf16.msra.mxu0 0
    %1327 = vmatprep.subr.bf16.mxu0 0
    %1328 = vmatpush1.bf16.msra.mxu0 0
    %1329 = vmatprep.subr.bf16.mxu0 0
    %1330 = vmatpush1.bf16.msra.mxu0 0
    %1331 = vmatprep.mubr.bf16.mxu0 0
    %1332 = vmatmul.mubr.bf16.gmra.mrb[0].mxu0 %v1297
    %v1333 = vpop.f32.mrb[0].mxu0
    %v1334 = vadd.f32 %v299, %v1333
    %v1335 = vpop.f32.mrb[0].mxu0
    %v1336 = vpop.f32.mrb[0].mxu0
    %v1337 = vpop.f32.mrb[0].mxu0
    %1338 = vdwg.mxu0
    %1340 = vrot.lane.b32.xlu0 %v1218, 32
    %v1341 = vpop.permute.xlu0 %1340
    %v1343 = vsel %vm222, %v1341, 0
    %1345 = vmatprep.subr.bf16.mxu0 0
    %1346 = vmatpush1.bf16.msra.mxu0 %v366
    %1347 = vmatprep.subr.bf16.mxu0 0
    %1348 = vmatpush1.bf16.msra.mxu0 %v367
    %1349 = vmatprep.subr.bf16.mxu0 0
    %1350 = vmatpush1.bf16.msra.mxu0 0
    %1351 = vmatprep.subr.bf16.mxu0 0
    %1352 = vmatpush1.bf16.msra.mxu0 0
    %1353 = vmatprep.subr.bf16.mxu0 0
    %1354 = vmatpush1.bf16.msra.mxu0 0
    %1355 = vmatprep.subr.bf16.mxu0 0
    %1356 = vmatpush1.bf16.msra.mxu0 0
    %1357 = vmatprep.subr.bf16.mxu0 0
    %1358 = vmatpush1.bf16.msra.mxu0 0
    %1359 = vmatprep.subr.bf16.mxu0 0
    %1360 = vmatpush1.bf16.msra.mxu0 0
    %1361 = vmatprep.subr.bf16.mxu0 0
    %1362 = vmatpush1.bf16.msra.mxu0 0
    %1363 = vmatprep.subr.bf16.mxu0 0
    %1364 = vmatpush1.bf16.msra.mxu0 0
    %1365 = vmatprep.subr.bf16.mxu0 0
    %1366 = vmatpush1.bf16.msra.mxu0 0
    %1367 = vmatprep.subr.bf16.mxu0 0
    %1368 = vmatpush1.bf16.msra.mxu0 0
    %1369 = vmatprep.subr.bf16.mxu0 0
    %1370 = vmatpush1.bf16.msra.mxu0 0
    %1371 = vmatprep.subr.bf16.mxu0 0
    %1372 = vmatpush1.bf16.msra.mxu0 0
    %1373 = vmatprep.subr.bf16.mxu0 0
    %1374 = vmatpush1.bf16.msra.mxu0 0
    %1375 = vmatprep.subr.bf16.mxu0 0
    %1376 = vmatpush1.bf16.msra.mxu0 0
    %1377 = vmatprep.mubr.bf16.mxu0 0
    %1378 = vmatmul.mubr.bf16.gmra.mrb[0].mxu0 %v1343
    %v1379 = vpop.f32.mrb[0].mxu0
    %v1380 = vadd.f32 0.0, %v1379
    %v1381 = vpop.f32.mrb[0].mxu0
    %v1382 = vpop.f32.mrb[0].mxu0
    %v1383 = vpop.f32.mrb[0].mxu0
    %1384 = vdwg.mxu0
    %v1385 = vadd.f32 %v1334, %v1380
    %v1386 = vxor.u32 %v1385, 2147483648
    %v1387 = vmul.f32 %v1386, 1.442695
    %v1388 = vpow.pop %v1387
    %v1389 = vadd.f32 %v1388, 1.0
    %v1390 = vrcp.pop %v1389
    %v1391 = vmul.f32 1.0, %v1390
    %v1392 = vtanh.pop %v1385
    %v1393 = vmul.f32 %v1391, %v1211
    %1395 = vrot.lane.b32.xlu0 %v1392, 64
    %v1396 = vpop.permute.xlu0 %1395
    %v1398 = vmul.f32 %v1391, %v1396
    %1400 = vrot.lane.b32.xlu0 %v1398, 32
    %v1401 = vpop.permute.xlu0 %1400
    %v1403 = vadd.f32 %v1393, %v1401
    %v1404 = vtanh.pop %v1403
    %1406 = vrot.lane.b32.xlu0 %v1404, 64
    %v1407 = vpop.permute.xlu0 %1406
    %v1409 = vmul.f32 %v1391, %v1407
    %v1410 = vpack.c.bf16 %v1409, %v1409
    %v1411 = vmul.f32 %v1409, %v449
    %1413 = vrot.lane.b32.xlu0 %v1411, 32
    %v1414 = vpop.permute.xlu0 %1413
    %v1416 = vsel %vm222, %v1414, 0.0
    %1417 = vadd.xlane.f32.xlu0 %v1416
    %v1418 = vpop.xlane.xlu0 %1417
    %1419 = vmatprep.subr.bf16.mxu0 0
    %1420 = vmatpush1.bf16.msra.mxu0 %v218
    %1421 = vmatprep.subr.bf16.mxu0 0
    %1422 = vmatpush1.bf16.msra.mxu0 %v219
    %1423 = vmatprep.subr.bf16.mxu0 0
    %1424 = vmatpush1.bf16.msra.mxu0 0
    %1425 = vmatprep.subr.bf16.mxu0 0
    %1426 = vmatpush1.bf16.msra.mxu0 0
    %1427 = vmatprep.subr.bf16.mxu0 0
    %1428 = vmatpush1.bf16.msra.mxu0 0
    %1429 = vmatprep.subr.bf16.mxu0 0
    %1430 = vmatpush1.bf16.msra.mxu0 0
    %1431 = vmatprep.subr.bf16.mxu0 0
    %1432 = vmatpush1.bf16.msra.mxu0 0
    %1433 = vmatprep.subr.bf16.mxu0 0
    %1434 = vmatpush1.bf16.msra.mxu0 0
    %1435 = vmatprep.subr.bf16.mxu0 0
    %1436 = vmatpush1.bf16.msra.mxu0 0
    %1437 = vmatprep.subr.bf16.mxu0 0
    %1438 = vmatpush1.bf16.msra.mxu0 0
    %1439 = vmatprep.subr.bf16.mxu0 0
    %1440 = vmatpush1.bf16.msra.mxu0 0
    %1441 = vmatprep.subr.bf16.mxu0 0
    %1442 = vmatpush1.bf16.msra.mxu0 0
    %1443 = vmatprep.subr.bf16.mxu0 0
    %1444 = vmatpush1.bf16.msra.mxu0 0
    %1445 = vmatprep.subr.bf16.mxu0 0
    %1446 = vmatpush1.bf16.msra.mxu0 0
    %1447 = vmatprep.subr.bf16.mxu0 0
    %1448 = vmatpush1.bf16.msra.mxu0 0
    %1449 = vmatprep.subr.bf16.mxu0 0
    %1450 = vmatpush1.bf16.msra.mxu0 0
    %1451 = vmatprep.mubr.bf16.mxu0 0
    %1452 = vmatmul.mubr.bf16.gmra.mrb[0].mxu0 %v1297
    %v1453 = vpop.f32.mrb[0].mxu0
    %v1454 = vadd.f32 0.0, %v1453
    %v1455 = vpop.f32.mrb[0].mxu0
    %v1456 = vpop.f32.mrb[0].mxu0
    %v1457 = vpop.f32.mrb[0].mxu0
    %1458 = vdwg.mxu0
    %v1459 = vadd.f32 %v202, %v1454
    %v1460 = vxor.u32 %v1459, 2147483648
    %v1461 = vmul.f32 %v1460, 1.442695
    %v1462 = vpow.pop %v1461
    %v1463 = vadd.f32 %v1462, 1.0
    %v1464 = vrcp.pop %v1463
    %v1465 = vmul.f32 1.0, %v1464
    %v1466 = vtanh.pop %v1459
    %v1467 = vmul.f32 %v1465, %v1285
    %1469 = vrot.lane.b32.xlu0 %v1466, 64
    %v1470 = vpop.permute.xlu0 %1469
    %v1472 = vmul.f32 %v1465, %v1470
    %1474 = vrot.lane.b32.xlu0 %v1472, 32
    %v1475 = vpop.permute.xlu0 %1474
    %v1477 = vadd.f32 %v1467, %v1475
    %v1478 = vtanh.pop %v1477
    %1480 = vrot.lane.b32.xlu0 %v1478, 64
    %v1481 = vpop.permute.xlu0 %1480
    %v1483 = vmul.f32 %v1465, %v1481
    %v1484 = vpack.c.bf16 %v1483, %v1483
    %1486 = vrot.lane.b32.xlu0 %v1484, 32
    %v1487 = vpop.permute.xlu0 %1486
    %v1489 = vsel %vm222, %v1487, 0
    %1491 = vmatprep.subr.bf16.mxu0 0
    %1492 = vmatpush1.bf16.msra.mxu0 %v311
    %1493 = vmatprep.subr.bf16.mxu0 0
    %1494 = vmatpush1.bf16.msra.mxu0 %v312
    %1495 = vmatprep.subr.bf16.mxu0 0
    %1496 = vmatpush1.bf16.msra.mxu0 0
    %1497 = vmatprep.subr.bf16.mxu0 0
    %1498 = vmatpush1.bf16.msra.mxu0 0
    %1499 = vmatprep.subr.bf16.mxu0 0
    %1500 = vmatpush1.bf16.msra.mxu0 0
    %1501 = vmatprep.subr.bf16.mxu0 0
    %1502 = vmatpush1.bf16.msra.mxu0 0
    %1503 = vmatprep.subr.bf16.mxu0 0
    %1504 = vmatpush1.bf16.msra.mxu0 0
    %1505 = vmatprep.subr.bf16.mxu0 0
    %1506 = vmatpush1.bf16.msra.mxu0 0
    %1507 = vmatprep.subr.bf16.mxu0 0
    %1508 = vmatpush1.bf16.msra.mxu0 0
    %1509 = vmatprep.subr.bf16.mxu0 0
    %1510 = vmatpush1.bf16.msra.mxu0 0
    %1511 = vmatprep.subr.bf16.mxu0 0
    %1512 = vmatpush1.bf16.msra.mxu0 0
    %1513 = vmatprep.subr.bf16.mxu0 0
    %1514 = vmatpush1.bf16.msra.mxu0 0
    %1515 = vmatprep.subr.bf16.mxu0 0
    %1516 = vmatpush1.bf16.msra.mxu0 0
    %1517 = vmatprep.subr.bf16.mxu0 0
    %1518 = vmatpush1.bf16.msra.mxu0 0
    %1519 = vmatprep.subr.bf16.mxu0 0
    %1520 = vmatpush1.bf16.msra.mxu0 0
    %1521 = vmatprep.subr.bf16.mxu0 0
    %1522 = vmatpush1.bf16.msra.mxu0 0
    %1523 = vmatprep.mubr.bf16.mxu0 0
    %1524 = vmatmul.mubr.bf16.gmra.mrb[0].mxu0 %v1489
    %v1525 = vpop.f32.mrb[0].mxu0
    %v1526 = vadd.f32 %v299, %v1525
    %v1527 = vpop.f32.mrb[0].mxu0
    %v1528 = vpop.f32.mrb[0].mxu0
    %v1529 = vpop.f32.mrb[0].mxu0
    %1530 = vdwg.mxu0
    %1532 = vrot.lane.b32.xlu0 %v1410, 32
    %v1533 = vpop.permute.xlu0 %1532
    %v1535 = vsel %vm222, %v1533, 0
    %1537 = vmatprep.subr.bf16.mxu0 0
    %1538 = vmatpush1.bf16.msra.mxu0 %v366
    %1539 = vmatprep.subr.bf16.mxu0 0
    %1540 = vmatpush1.bf16.msra.mxu0 %v367
    %1541 = vmatprep.subr.bf16.mxu0 0
    %1542 = vmatpush1.bf16.msra.mxu0 0
    %1543 = vmatprep.subr.bf16.mxu0 0
    %1544 = vmatpush1.bf16.msra.mxu0 0
    %1545 = vmatprep.subr.bf16.mxu0 0
    %1546 = vmatpush1.bf16.msra.mxu0 0
    %1547 = vmatprep.subr.bf16.mxu0 0
    %1548 = vmatpush1.bf16.msra.mxu0 0
    %1549 = vmatprep.subr.bf16.mxu0 0
    %1550 = vmatpush1.bf16.msra.mxu0 0
    %1551 = vmatprep.subr.bf16.mxu0 0
    %1552 = vmatpush1.bf16.msra.mxu0 0
    %1553 = vmatprep.subr.bf16.mxu0 0
    %1554 = vmatpush1.bf16.msra.mxu0 0
    %1555 = vmatprep.subr.bf16.mxu0 0
    %1556 = vmatpush1.bf16.msra.mxu0 0
    %1557 = vmatprep.subr.bf16.mxu0 0
    %1558 = vmatpush1.bf16.msra.mxu0 0
    %1559 = vmatprep.subr.bf16.mxu0 0
    %1560 = vmatpush1.bf16.msra.mxu0 0
    %1561 = vmatprep.subr.bf16.mxu0 0
    %1562 = vmatpush1.bf16.msra.mxu0 0
    %1563 = vmatprep.subr.bf16.mxu0 0
    %1564 = vmatpush1.bf16.msra.mxu0 0
    %1565 = vmatprep.subr.bf16.mxu0 0
    %1566 = vmatpush1.bf16.msra.mxu0 0
    %1567 = vmatprep.subr.bf16.mxu0 0
    %1568 = vmatpush1.bf16.msra.mxu0 0
    %1569 = vmatprep.mubr.bf16.mxu0 0
    %1570 = vmatmul.mubr.bf16.gmra.mrb[0].mxu0 %v1535
    %v1571 = vpop.f32.mrb[0].mxu0
    %v1572 = vadd.f32 0.0, %v1571
    %v1573 = vpop.f32.mrb[0].mxu0
    %v1574 = vpop.f32.mrb[0].mxu0
    %v1575 = vpop.f32.mrb[0].mxu0
    %1576 = vdwg.mxu0
    %v1577 = vadd.f32 %v1526, %v1572
    %v1578 = vxor.u32 %v1577, 2147483648
    %v1579 = vmul.f32 %v1578, 1.442695
    %v1580 = vpow.pop %v1579
    %v1581 = vadd.f32 %v1580, 1.0
    %v1582 = vrcp.pop %v1581
    %v1583 = vmul.f32 1.0, %v1582
    %v1584 = vtanh.pop %v1577
    %v1585 = vmul.f32 %v1583, %v1403
    %1587 = vrot.lane.b32.xlu0 %v1584, 64
    %v1588 = vpop.permute.xlu0 %1587
    %v1590 = vmul.f32 %v1583, %v1588
    %1592 = vrot.lane.b32.xlu0 %v1590, 32
    %v1593 = vpop.permute.xlu0 %1592
    %v1595 = vadd.f32 %v1585, %v1593
    %v1596 = vtanh.pop %v1595
    %1598 = vrot.lane.b32.xlu0 %v1596, 64
    %v1599 = vpop.permute.xlu0 %1598
    %v1601 = vmul.f32 %v1583, %v1599
    %v1602 = vpack.c.bf16 %v1601, %v1601
    %v1603 = vmul.f32 %v1601, %v449
    %1605 = vrot.lane.b32.xlu0 %v1603, 32
    %v1606 = vpop.permute.xlu0 %1605
    %v1608 = vsel %vm222, %v1606, 0.0
    %1609 = vadd.xlane.f32.xlu0 %v1608
    %v1610 = vpop.xlane.xlu0 %1609
    %1611 = vmatprep.subr.bf16.mxu0 0
    %1612 = vmatpush1.bf16.msra.mxu0 %v218
    %1613 = vmatprep.subr.bf16.mxu0 0
    %1614 = vmatpush1.bf16.msra.mxu0 %v219
    %1615 = vmatprep.subr.bf16.mxu0 0
    %1616 = vmatpush1.bf16.msra.mxu0 0
    %1617 = vmatprep.subr.bf16.mxu0 0
    %1618 = vmatpush1.bf16.msra.mxu0 0
    %1619 = vmatprep.subr.bf16.mxu0 0
    %1620 = vmatpush1.bf16.msra.mxu0 0
    %1621 = vmatprep.subr.bf16.mxu0 0
    %1622 = vmatpush1.bf16.msra.mxu0 0
    %1623 = vmatprep.subr.bf16.mxu0 0
    %1624 = vmatpush1.bf16.msra.mxu0 0
    %1625 = vmatprep.subr.bf16.mxu0 0
    %1626 = vmatpush1.bf16.msra.mxu0 0
    %1627 = vmatprep.subr.bf16.mxu0 0
    %1628 = vmatpush1.bf16.msra.mxu0 0
    %1629 = vmatprep.subr.bf16.mxu0 0
    %1630 = vmatpush1.bf16.msra.mxu0 0
    %1631 = vmatprep.subr.bf16.mxu0 0
    %1632 = vmatpush1.bf16.msra.mxu0 0
    %1633 = vmatprep.subr.bf16.mxu0 0
    %1634 = vmatpush1.bf16.msra.mxu0 0
    %1635 = vmatprep.subr.bf16.mxu0 0
    %1636 = vmatpush1.bf16.msra.mxu0 0
    %1637 = vmatprep.subr.bf16.mxu0 0
    %1638 = vmatpush1.bf16.msra.mxu0 0
    %1639 = vmatprep.subr.bf16.mxu0 0
    %1640 = vmatpush1.bf16.msra.mxu0 0
    %1641 = vmatprep.subr.bf16.mxu0 0
    %1642 = vmatpush1.bf16.msra.mxu0 0
    %1643 = vmatprep.mubr.bf16.mxu0 0
    %1644 = vmatmul.mubr.bf16.gmra.mrb[0].mxu0 %v1489
    %v1645 = vpop.f32.mrb[0].mxu0
    %v1646 = vadd.f32 0.0, %v1645
    %v1647 = vpop.f32.mrb[0].mxu0
    %v1648 = vpop.f32.mrb[0].mxu0
    %v1649 = vpop.f32.mrb[0].mxu0
    %1650 = vdwg.mxu0
    %v1651 = vadd.f32 %v205, %v1646
    %v1652 = vxor.u32 %v1651, 2147483648
    %v1653 = vmul.f32 %v1652, 1.442695
    %v1654 = vpow.pop %v1653
    %v1655 = vadd.f32 %v1654, 1.0
    %v1656 = vrcp.pop %v1655
    %v1657 = vmul.f32 1.0, %v1656
    %v1658 = vtanh.pop %v1651
    %v1659 = vmul.f32 %v1657, %v1477
    %1661 = vrot.lane.b32.xlu0 %v1658, 64
    %v1662 = vpop.permute.xlu0 %1661
    %v1664 = vmul.f32 %v1657, %v1662
    %1666 = vrot.lane.b32.xlu0 %v1664, 32
    %v1667 = vpop.permute.xlu0 %1666
    %v1669 = vadd.f32 %v1659, %v1667
    %v1670 = vtanh.pop %v1669
    %1672 = vrot.lane.b32.xlu0 %v1670, 64
    %v1673 = vpop.permute.xlu0 %1672
    %v1675 = vmul.f32 %v1657, %v1673
    %v1676 = vpack.c.bf16 %v1675, %v1675
    %1678 = vrot.lane.b32.xlu0 %v1676, 32
    %v1679 = vpop.permute.xlu0 %1678
    %v1681 = vsel %vm222, %v1679, 0
    %1683 = vmatprep.subr.bf16.mxu0 0
    %1684 = vmatpush1.bf16.msra.mxu0 %v311
    %1685 = vmatprep.subr.bf16.mxu0 0
    %1686 = vmatpush1.bf16.msra.mxu0 %v312
    %1687 = vmatprep.subr.bf16.mxu0 0
    %1688 = vmatpush1.bf16.msra.mxu0 0
    %1689 = vmatprep.subr.bf16.mxu0 0
    %1690 = vmatpush1.bf16.msra.mxu0 0
    %1691 = vmatprep.subr.bf16.mxu0 0
    %1692 = vmatpush1.bf16.msra.mxu0 0
    %1693 = vmatprep.subr.bf16.mxu0 0
    %1694 = vmatpush1.bf16.msra.mxu0 0
    %1695 = vmatprep.subr.bf16.mxu0 0
    %1696 = vmatpush1.bf16.msra.mxu0 0
    %1697 = vmatprep.subr.bf16.mxu0 0
    %1698 = vmatpush1.bf16.msra.mxu0 0
    %1699 = vmatprep.subr.bf16.mxu0 0
    %1700 = vmatpush1.bf16.msra.mxu0 0
    %1701 = vmatprep.subr.bf16.mxu0 0
    %1702 = vmatpush1.bf16.msra.mxu0 0
    %1703 = vmatprep.subr.bf16.mxu0 0
    %1704 = vmatpush1.bf16.msra.mxu0 0
    %1705 = vmatprep.subr.bf16.mxu0 0
    %1706 = vmatpush1.bf16.msra.mxu0 0
    %1707 = vmatprep.subr.bf16.mxu0 0
    %1708 = vmatpush1.bf16.msra.mxu0 0
    %1709 = vmatprep.subr.bf16.mxu0 0
    %1710 = vmatpush1.bf16.msra.mxu0 0
    %1711 = vmatprep.subr.bf16.mxu0 0
    %1712 = vmatpush1.bf16.msra.mxu0 0
    %1713 = vmatprep.subr.bf16.mxu0 0
    %1714 = vmatpush1.bf16.msra.mxu0 0
    %1715 = vmatprep.mubr.bf16.mxu0 0
    %1716 = vmatmul.mubr.bf16.gmra.mrb[0].mxu0 %v1681
    %v1717 = vpop.f32.mrb[0].mxu0
    %v1718 = vadd.f32 %v299, %v1717
    %v1719 = vpop.f32.mrb[0].mxu0
    %v1720 = vpop.f32.mrb[0].mxu0
    %v1721 = vpop.f32.mrb[0].mxu0
    %1722 = vdwg.mxu0
    %1724 = vrot.lane.b32.xlu0 %v1602, 32
    %v1725 = vpop.permute.xlu0 %1724
    %v1727 = vsel %vm222, %v1725, 0
    %1729 = vmatprep.subr.bf16.mxu0 0
    %1730 = vmatpush1.bf16.msra.mxu0 %v366
    %1731 = vmatprep.subr.bf16.mxu0 0
    %1732 = vmatpush1.bf16.msra.mxu0 %v367
    %1733 = vmatprep.subr.bf16.mxu0 0
    %1734 = vmatpush1.bf16.msra.mxu0 0
    %1735 = vmatprep.subr.bf16.mxu0 0
    %1736 = vmatpush1.bf16.msra.mxu0 0
    %1737 = vmatprep.subr.bf16.mxu0 0
    %1738 = vmatpush1.bf16.msra.mxu0 0
    %1739 = vmatprep.subr.bf16.mxu0 0
    %1740 = vmatpush1.bf16.msra.mxu0 0
    %1741 = vmatprep.subr.bf16.mxu0 0
    %1742 = vmatpush1.bf16.msra.mxu0 0
    %1743 = vmatprep.subr.bf16.mxu0 0
    %1744 = vmatpush1.bf16.msra.mxu0 0
    %1745 = vmatprep.subr.bf16.mxu0 0
    %1746 = vmatpush1.bf16.msra.mxu0 0
    %1747 = vmatprep.subr.bf16.mxu0 0
    %1748 = vmatpush1.bf16.msra.mxu0 0
    %1749 = vmatprep.subr.bf16.mxu0 0
    %1750 = vmatpush1.bf16.msra.mxu0 0
    %1751 = vmatprep.subr.bf16.mxu0 0
    %1752 = vmatpush1.bf16.msra.mxu0 0
    %1753 = vmatprep.subr.bf16.mxu0 0
    %1754 = vmatpush1.bf16.msra.mxu0 0
    %1755 = vmatprep.subr.bf16.mxu0 0
    %1756 = vmatpush1.bf16.msra.mxu0 0
    %1757 = vmatprep.subr.bf16.mxu0 0
    %1758 = vmatpush1.bf16.msra.mxu0 0
    %1759 = vmatprep.subr.bf16.mxu0 0
    %1760 = vmatpush1.bf16.msra.mxu0 0
    %1761 = vmatprep.mubr.bf16.mxu0 0
    %1762 = vmatmul.mubr.bf16.gmra.mrb[0].mxu0 %v1727
    %v1763 = vpop.f32.mrb[0].mxu0
    %v1764 = vadd.f32 0.0, %v1763
    %v1765 = vpop.f32.mrb[0].mxu0
    %v1766 = vpop.f32.mrb[0].mxu0
    %v1767 = vpop.f32.mrb[0].mxu0
    %1768 = vdwg.mxu0
    %v1769 = vadd.f32 %v1718, %v1764
    %v1770 = vxor.u32 %v1769, 2147483648
    %v1771 = vmul.f32 %v1770, 1.442695
    %v1772 = vpow.pop %v1771
    %v1773 = vadd.f32 %v1772, 1.0
    %v1774 = vrcp.pop %v1773
    %v1775 = vmul.f32 1.0, %v1774
    %v1776 = vtanh.pop %v1769
    %v1777 = vmul.f32 %v1775, %v1595
    %1779 = vrot.lane.b32.xlu0 %v1776, 64
    %v1780 = vpop.permute.xlu0 %1779
    %v1782 = vmul.f32 %v1775, %v1780
    %1784 = vrot.lane.b32.xlu0 %v1782, 32
    %v1785 = vpop.permute.xlu0 %1784
    %v1787 = vadd.f32 %v1777, %v1785
    %v1788 = vtanh.pop %v1787
    %1790 = vrot.lane.b32.xlu0 %v1788, 64
    %v1791 = vpop.permute.xlu0 %1790
    %v1793 = vmul.f32 %v1775, %v1791
    %v1794 = vmul.f32 %v1793, %v449
    %1796 = vrot.lane.b32.xlu0 %v1794, 32
    %v1797 = vpop.permute.xlu0 %1796
    %v1799 = vsel %vm222, %v1797, 0.0
    %1800 = vadd.xlane.f32.xlu0 %v1799
    %v1801 = vpop.xlane.xlu0 %1800
    %v1802 = vmax.f32 %v458, %v650
    %v1803 = vmax.f32 %v1802, %v842
    %v1804 = vmax.f32 %v1803, %v1034
    %v1805 = vmax.f32 %v1804, %v1226
    %v1806 = vmax.f32 %v1805, %v1418
    %v1807 = vmax.f32 %v1806, %v1610
    %v1808 = vmax.f32 %v1807, %v1801
    %v1809 = vsub.f32 %v458, %v1808
    %v1810 = vmul.f32 %v1809, 1.442695
    %v1811 = vpow.pop %v1810
    %v1812 = vsub.f32 %v650, %v1808
    %v1813 = vmul.f32 %v1812, 1.442695
    %v1814 = vpow.pop %v1813
    %v1815 = vsub.f32 %v842, %v1808
    %v1816 = vmul.f32 %v1815, 1.442695
    %v1817 = vpow.pop %v1816
    %v1818 = vsub.f32 %v1034, %v1808
    %v1819 = vmul.f32 %v1818, 1.442695
    %v1820 = vpow.pop %v1819
    %v1821 = vsub.f32 %v1226, %v1808
    %v1822 = vmul.f32 %v1821, 1.442695
    %v1823 = vpow.pop %v1822
    %v1824 = vsub.f32 %v1418, %v1808
    %v1825 = vmul.f32 %v1824, 1.442695
    %v1826 = vpow.pop %v1825
    %v1827 = vsub.f32 %v1610, %v1808
    %v1828 = vmul.f32 %v1827, 1.442695
    %v1829 = vpow.pop %v1828
    %v1830 = vsub.f32 %v1801, %v1808
    %v1831 = vmul.f32 %v1830, 1.442695
    %v1832 = vpow.pop %v1831
    %v1833 = vadd.f32 %v1811, %v1814
    %v1834 = vadd.f32 %v1833, %v1817
    %v1835 = vadd.f32 %v1834, %v1820
    %v1836 = vadd.f32 %v1835, %v1823
    %v1837 = vadd.f32 %v1836, %v1826
    %v1838 = vadd.f32 %v1837, %v1829
    %v1839 = vadd.f32 %v1838, %v1832
    %v1840 = vrcp.pop %v1839
    %v1841 = vmul.f32 %v1811, %v1840
    %v1842 = vmul.f32 %v1841, %v441
    %v1843 = vmul.f32 %v1814, %v1840
    %v1844 = vmul.f32 %v1843, %v641
    %v1845 = vadd.f32 %v1842, %v1844
    %v1846 = vmul.f32 %v1817, %v1840
    %v1847 = vmul.f32 %v1846, %v833
    %v1848 = vadd.f32 %v1845, %v1847
    %v1849 = vmul.f32 %v1820, %v1840
    %v1850 = vmul.f32 %v1849, %v1025
    %v1851 = vadd.f32 %v1848, %v1850
    %v1852 = vmul.f32 %v1823, %v1840
    %v1853 = vmul.f32 %v1852, %v1217
    %v1854 = vadd.f32 %v1851, %v1853
    %v1855 = vmul.f32 %v1826, %v1840
    %v1856 = vmul.f32 %v1855, %v1409
    %v1857 = vadd.f32 %v1854, %v1856
    %v1858 = vmul.f32 %v1829, %v1840
    %v1859 = vmul.f32 %v1858, %v1601
    %v1860 = vadd.f32 %v1857, %v1859
    %v1861 = vmul.f32 %v1832, %v1840
    %v1862 = vmul.f32 %v1861, %v1793
    %v1863 = vadd.f32 %v1860, %v1862
    %v1864 = vld [vmem:[#allocation2] sm:$0xff]
    %v1865 = vpack.c.bf16 %v1864, %v1864
    %v1866 = vld [vmem:[#allocation2 + $0x8] sm:$0xff]
    %v1867 = vpack.c.bf16 %v1866, %v1866
    %v1868 = vld [vmem:[#allocation7 + $0x3c] sm:$0xf]
    %v1869 = vld [vmem:[#allocation7 + $0x40] sm:$0x3]
    %v1870 = vld [vmem:[%s4 + $0x10] sm:$0x1]
    %v1871 = vlaneseq
    %v1872 = vshrl.u32 %v1871, 7
    %v1873 = vsub.s32 0, %v1872
    %v1874 = vrot.slane %v1870, %v1873
    %v1877 = vunpack.c.l.b16 %v1868
    %v1878 = vunpack.c.l.b16 %v1869
    %v1879 = vpack.c.b16 %v1878, %v1877
    %vm1880 = vcmask 97280
    %v1882 = vsel %vm1880, %v1867, 0
    %vm1884 = vcmask 1045504
    %v1886 = vsel %vm1884, %v1879, 0
    %1888 = vmatprep.subr.bf16.mxu0 0
    %1889 = vmatpush1.bf16.msra.mxu0 %v1886
    %1890 = vmatprep.subr.bf16.mxu0 0
    %1891 = vmatpush1.bf16.msra.mxu0 0
    %1892 = vmatprep.subr.bf16.mxu0 0
    %1893 = vmatpush1.bf16.msra.mxu0 0
    %1894 = vmatprep.subr.bf16.mxu0 0
    %1895 = vmatpush1.bf16.msra.mxu0 0
    %1896 = vmatprep.subr.bf16.mxu0 0
    %1897 = vmatpush1.bf16.msra.mxu0 0
    %1898 = vmatprep.subr.bf16.mxu0 0
    %1899 = vmatpush1.bf16.msra.mxu0 0
    %1900 = vmatprep.subr.bf16.mxu0 0
    %1901 = vmatpush1.bf16.msra.mxu0 0
    %1902 = vmatprep.subr.bf16.mxu0 0
    %1903 = vmatpush1.bf16.msra.mxu0 0
    %1904 = vmatprep.subr.bf16.mxu0 0
    %1905 = vmatpush1.bf16.msra.mxu0 0
    %1906 = vmatprep.subr.bf16.mxu0 0
    %1907 = vmatpush1.bf16.msra.mxu0 0
    %1908 = vmatprep.subr.bf16.mxu0 0
    %1909 = vmatpush1.bf16.msra.mxu0 0
    %1910 = vmatprep.subr.bf16.mxu0 0
    %1911 = vmatpush1.bf16.msra.mxu0 0
    %1912 = vmatprep.subr.bf16.mxu0 0
    %1913 = vmatpush1.bf16.msra.mxu0 0
    %1914 = vmatprep.subr.bf16.mxu0 0
    %1915 = vmatpush1.bf16.msra.mxu0 0
    %1916 = vmatprep.subr.bf16.mxu0 0
    %1917 = vmatpush1.bf16.msra.mxu0 0
    %1918 = vmatprep.subr.bf16.mxu0 0
    %1919 = vmatpush1.bf16.msra.mxu0 0
    %1920 = vmatprep.mubr.bf16.mxu0 0
    %1921 = vmatmul.mubr.bf16.gmra.mrb[0].mxu0 %v1882
    %v1922 = vpop.f32.mrb[0].mxu0
    %v1923 = vadd.f32 %v1874, %v1922
    %v1924 = vpop.f32.mrb[0].mxu0
    %v1925 = vpop.f32.mrb[0].mxu0
    %v1926 = vpop.f32.mrb[0].mxu0
    %1927 = vdwg.mxu0
    %v1928 = vmax.f32 %v1923, 0.0
    %v1929 = vpack.c.bf16 %v1863, %v1863
    %v1930 = vld [vmem:[#allocation7 + $0x44] sm:$0xf]
    %v1931 = vld [vmem:[#allocation7 + $0x48] sm:$0xf]
    %v1932 = vld [vmem:[#allocation7 + $0x4c] sm:$0xf]
    %v1933 = vld [vmem:[#allocation7 + $0x50] sm:$0xf]
    %v1934 = vpack.c.bf16 %v1793, %v1793
    %v1935 = vld [vmem:[#allocation7 + $0x54] sm:$0xf]
    %v1936 = vld [vmem:[#allocation7 + $0x58] sm:$0xf]
    %v1937 = vld [vmem:[#allocation7 + $0x5c] sm:$0xf]
    %v1938 = vld [vmem:[#allocation7 + $0x60] sm:$0xf]
    %1940 = vrot.lane.b32.xlu0 %v1934, 32
    %v1941 = vpop.permute.xlu0 %1940
    %v1946 = vunpack.c.l.b16 %v1935
    %v1947 = vunpack.c.l.b16 %v1936
    %v1948 = vunpack.c.l.b16 %v1937
    %v1949 = vunpack.c.l.b16 %v1938
    %v1950 = vpack.c.b16 %v1947, %v1946
    %v1951 = vpack.c.b16 %v1949, %v1948
    %v1955 = vsel %vm222, %v1941, 0
    %1957 = vmatprep.subr.bf16.mxu0 0
    %1958 = vmatpush1.bf16.msra.mxu0 %v1950
    %1959 = vmatprep.subr.bf16.mxu0 0
    %1960 = vmatpush1.bf16.msra.mxu0 %v1951
    %1961 = vmatprep.subr.bf16.mxu0 0
    %1962 = vmatpush1.bf16.msra.mxu0 0
    %1963 = vmatprep.subr.bf16.mxu0 0
    %1964 = vmatpush1.bf16.msra.mxu0 0
    %1965 = vmatprep.subr.bf16.mxu0 0
    %1966 = vmatpush1.bf16.msra.mxu0 0
    %1967 = vmatprep.subr.bf16.mxu0 0
    %1968 = vmatpush1.bf16.msra.mxu0 0
    %1969 = vmatprep.subr.bf16.mxu0 0
    %1970 = vmatpush1.bf16.msra.mxu0 0
    %1971 = vmatprep.subr.bf16.mxu0 0
    %1972 = vmatpush1.bf16.msra.mxu0 0
    %1973 = vmatprep.subr.bf16.mxu0 0
    %1974 = vmatpush1.bf16.msra.mxu0 0
    %1975 = vmatprep.subr.bf16.mxu0 0
    %1976 = vmatpush1.bf16.msra.mxu0 0
    %1977 = vmatprep.subr.bf16.mxu0 0
    %1978 = vmatpush1.bf16.msra.mxu0 0
    %1979 = vmatprep.subr.bf16.mxu0 0
    %1980 = vmatpush1.bf16.msra.mxu0 0
    %1981 = vmatprep.subr.bf16.mxu0 0
    %1982 = vmatpush1.bf16.msra.mxu0 0
    %1983 = vmatprep.subr.bf16.mxu0 0
    %1984 = vmatpush1.bf16.msra.mxu0 0
    %1985 = vmatprep.subr.bf16.mxu0 0
    %1986 = vmatpush1.bf16.msra.mxu0 0
    %1987 = vmatprep.subr.bf16.mxu0 0
    %1988 = vmatpush1.bf16.msra.mxu0 0
    %1989 = vmatprep.mubr.bf16.mxu0 0
    %1990 = vmatmul.mubr.bf16.gmra.mrb[0].mxu0 %v1955
    %v1991 = vpop.f32.mrb[0].mxu0
    %v1992 = vadd.f32 0.0, %v1991
    %v1993 = vpop.f32.mrb[0].mxu0
    %v1994 = vpop.f32.mrb[0].mxu0
    %v1995 = vpop.f32.mrb[0].mxu0
    %1996 = vdwg.mxu0
    %1998 = vrot.lane.b32.xlu0 %v1929, 32
    %v1999 = vpop.permute.xlu0 %1998
    %v2004 = vunpack.c.l.b16 %v1930
    %v2005 = vunpack.c.l.b16 %v1931
    %v2006 = vunpack.c.l.b16 %v1932
    %v2007 = vunpack.c.l.b16 %v1933
    %v2008 = vpack.c.b16 %v2005, %v2004
    %v2009 = vpack.c.b16 %v2007, %v2006
    %v2013 = vsel %vm222, %v1999, 0
    %2015 = vmatprep.subr.bf16.mxu0 0
    %2016 = vmatpush1.bf16.msra.mxu0 %v2008
    %2017 = vmatprep.subr.bf16.mxu0 0
    %2018 = vmatpush1.bf16.msra.mxu0 %v2009
    %2019 = vmatprep.subr.bf16.mxu0 0
    %2020 = vmatpush1.bf16.msra.mxu0 0
    %2021 = vmatprep.subr.bf16.mxu0 0
    %2022 = vmatpush1.bf16.msra.mxu0 0
    %2023 = vmatprep.subr.bf16.mxu0 0
    %2024 = vmatpush1.bf16.msra.mxu0 0
    %2025 = vmatprep.subr.bf16.mxu0 0
    %2026 = vmatpush1.bf16.msra.mxu0 0
    %2027 = vmatprep.subr.bf16.mxu0 0
    %2028 = vmatpush1.bf16.msra.mxu0 0
    %2029 = vmatprep.subr.bf16.mxu0 0
    %2030 = vmatpush1.bf16.msra.mxu0 0
    %2031 = vmatprep.subr.bf16.mxu0 0
    %2032 = vmatpush1.bf16.msra.mxu0 0
    %2033 = vmatprep.subr.bf16.mxu0 0
    %2034 = vmatpush1.bf16.msra.mxu0 0
    %2035 = vmatprep.subr.bf16.mxu0 0
    %2036 = vmatpush1.bf16.msra.mxu0 0
    %2037 = vmatprep.subr.bf16.mxu0 0
    %2038 = vmatpush1.bf16.msra.mxu0 0
    %2039 = vmatprep.subr.bf16.mxu0 0
    %2040 = vmatpush1.bf16.msra.mxu0 0
    %2041 = vmatprep.subr.bf16.mxu0 0
    %2042 = vmatpush1.bf16.msra.mxu0 0
    %2043 = vmatprep.subr.bf16.mxu0 0
    %2044 = vmatpush1.bf16.msra.mxu0 0
    %2045 = vmatprep.subr.bf16.mxu0 0
    %2046 = vmatpush1.bf16.msra.mxu0 0
    %2047 = vmatprep.mubr.bf16.mxu0 0
    %2048 = vmatmul.mubr.bf16.gmra.mrb[0].mxu0 %v2013
    %v2049 = vpop.f32.mrb[0].mxu0
    %v2050 = vadd.f32 %v1992, %v2049
    %v2051 = vpop.f32.mrb[0].mxu0
    %v2052 = vpop.f32.mrb[0].mxu0
    %v2053 = vpop.f32.mrb[0].mxu0
    %2054 = vdwg.mxu0
    %v2055 = vld [vmem:[#allocation7 + $0x64] sm:$0xf]
    %v2056 = vld [vmem:[#allocation7 + $0x68] sm:$0x1]
    %v2059 = vunpack.c.l.b16 %v2055
    %v2060 = vunpack.c.l.b16 %v2056
    %v2061 = vpack.c.b16 %v2060, %v2059
    %vm2062 = vcmask 80896
    %v2064 = vsel %vm2062, %v1865, 0
    %vm2066 = vcmask 1044480
    %v2068 = vsel %vm2066, %v2061, 0
    %2070 = vmatprep.subr.bf16.mxu0 0
    %2071 = vmatpush1.bf16.msra.mxu0 %v2068
    %2072 = vmatprep.subr.bf16.mxu0 0
    %2073 = vmatpush1.bf16.msra.mxu0 0
    %2074 = vmatprep.subr.bf16.mxu0 0
    %2075 = vmatpush1.bf16.msra.mxu0 0
    %2076 = vmatprep.subr.bf16.mxu0 0
    %2077 = vmatpush1.bf16.msra.mxu0 0
    %2078 = vmatprep.subr.bf16.mxu0 0
    %2079 = vmatpush1.bf16.msra.mxu0 0
    %2080 = vmatprep.subr.bf16.mxu0 0
    %2081 = vmatpush1.bf16.msra.mxu0 0
    %2082 = vmatprep.subr.bf16.mxu0 0
    %2083 = vmatpush1.bf16.msra.mxu0 0
    %2084 = vmatprep.subr.bf16.mxu0 0
    %2085 = vmatpush1.bf16.msra.mxu0 0
    %2086 = vmatprep.subr.bf16.mxu0 0
    %2087 = vmatpush1.bf16.msra.mxu0 0
    %2088 = vmatprep.subr.bf16.mxu0 0
    %2089 = vmatpush1.bf16.msra.mxu0 0
    %2090 = vmatprep.subr.bf16.mxu0 0
    %2091 = vmatpush1.bf16.msra.mxu0 0
    %2092 = vmatprep.subr.bf16.mxu0 0
    %2093 = vmatpush1.bf16.msra.mxu0 0
    %2094 = vmatprep.subr.bf16.mxu0 0
    %2095 = vmatpush1.bf16.msra.mxu0 0
    %2096 = vmatprep.subr.bf16.mxu0 0
    %2097 = vmatpush1.bf16.msra.mxu0 0
    %2098 = vmatprep.subr.bf16.mxu0 0
    %2099 = vmatpush1.bf16.msra.mxu0 0
    %2100 = vmatprep.subr.bf16.mxu0 0
    %2101 = vmatpush1.bf16.msra.mxu0 0
    %2102 = vmatprep.mubr.bf16.mxu0 0
    %2103 = vmatmul.mubr.bf16.gmra.mrb[0].mxu0 %v2064
    %v2104 = vpop.f32.mrb[0].mxu0
    %v2105 = vadd.f32 0.0, %v2104
    %v2106 = vpop.f32.mrb[0].mxu0
    %v2107 = vpop.f32.mrb[0].mxu0
    %v2108 = vpop.f32.mrb[0].mxu0
    %2109 = vdwg.mxu0
    %v2110 = vadd.f32 %v2050, %v2105
    %v2111 = vpack.c.bf16 %v1928, %v1928
    %v2112 = vld [vmem:[#allocation7 + $0x6c] sm:$0xf]
    %vm2113 = vcmask 64512
    %v2115 = vsel %vm2113, %v2111, 0
    %v2118 = vsel %vm139, %v2112, 0
    %2120 = vmatprep.subr.bf16.mxu0 0
    %2121 = vmatpush1.bf16.msra.mxu0 %v2118
    %2122 = vmatprep.subr.bf16.mxu0 0
    %2123 = vmatpush1.bf16.msra.mxu0 0
    %2124 = vmatprep.subr.bf16.mxu0 0
    %2125 = vmatpush1.bf16.msra.mxu0 0
    %2126 = vmatprep.subr.bf16.mxu0 0
    %2127 = vmatpush1.bf16.msra.mxu0 0
    %2128 = vmatprep.subr.bf16.mxu0 0
    %2129 = vmatpush1.bf16.msra.mxu0 0
    %2130 = vmatprep.subr.bf16.mxu0 0
    %2131 = vmatpush1.bf16.msra.mxu0 0
    %2132 = vmatprep.subr.bf16.mxu0 0
    %2133 = vmatpush1.bf16.msra.mxu0 0
    %2134 = vmatprep.subr.bf16.mxu0 0
    %2135 = vmatpush1.bf16.msra.mxu0 0
    %2136 = vmatprep.subr.bf16.mxu0 0
    %2137 = vmatpush1.bf16.msra.mxu0 0
    %2138 = vmatprep.subr.bf16.mxu0 0
    %2139 = vmatpush1.bf16.msra.mxu0 0
    %2140 = vmatprep.subr.bf16.mxu0 0
    %2141 = vmatpush1.bf16.msra.mxu0 0
    %2142 = vmatprep.subr.bf16.mxu0 0
    %2143 = vmatpush1.bf16.msra.mxu0 0
    %2144 = vmatprep.subr.bf16.mxu0 0
    %2145 = vmatpush1.bf16.msra.mxu0 0
    %2146 = vmatprep.subr.bf16.mxu0 0
    %2147 = vmatpush1.bf16.msra.mxu0 0
    %2148 = vmatprep.subr.bf16.mxu0 0
    %2149 = vmatpush1.bf16.msra.mxu0 0
    %2150 = vmatprep.subr.bf16.mxu0 0
    %2151 = vmatpush1.bf16.msra.mxu0 0
    %2152 = vmatprep.mubr.bf16.mxu0 0
    %2153 = vmatmul.mubr.bf16.gmra.mrb[0].mxu0 %v2115
    %v2154 = vpop.f32.mrb[0].mxu0
    %v2155 = vadd.f32 0.0, %v2154
    %v2156 = vpop.f32.mrb[0].mxu0
    %v2157 = vpop.f32.mrb[0].mxu0
    %v2158 = vpop.f32.mrb[0].mxu0
    %2159 = vdwg.mxu0
    %v2160 = vadd.f32 %v2110, %v2155
    %v2161 = vld [vmem:[%s4 + $0x18] sm:$0x1]
    %v2162 = vlaneseq
    %v2163 = vshrl.u32 %v2162, 7
    %v2164 = vsub.s32 0, %v2163
    %v2165 = vrot.slane %v2161, %v2164
    %v2166 = vadd.f32 %v2160, %v2165
    %v2167 = vpack.c.bf16 %v2166, %v2166
    %v2168 = vld [vmem:[#allocation7 + $0x70] sm:$0xf]
    %v2169 = vld [vmem:[#allocation7 + $0x74] sm:$0xf]
    %v2170 = vld [vmem:[#allocation7 + $0x78] sm:$0xf]
    %v2171 = vld [vmem:[#allocation7 + $0x7c] sm:$0xf]
    %v2172 = vld [vmem:[%s4 + $0x20] sm:$0x1]
    %v2173 = vlaneseq
    %v2174 = vshrl.u32 %v2173, 7
    %v2175 = vsub.s32 0, %v2174
    %v2176 = vrot.slane %v2172, %v2175
    %v2181 = vunpack.c.l.b16 %v2168
    %v2182 = vunpack.c.l.b16 %v2169
    %v2183 = vunpack.c.l.b16 %v2170
    %v2184 = vunpack.c.l.b16 %v2171
    %v2185 = vpack.c.b16 %v2182, %v2181
    %v2186 = vpack.c.b16 %v2184, %v2183
    %v2190 = vsel %vm222, %v2167, 0
    %2192 = vmatprep.subr.bf16.mxu0 0
    %2193 = vmatpush1.bf16.msra.mxu0 %v2185
    %2194 = vmatprep.subr.bf16.mxu0 0
    %2195 = vmatpush1.bf16.msra.mxu0 %v2186
    %2196 = vmatprep.subr.bf16.mxu0 0
    %2197 = vmatpush1.bf16.msra.mxu0 0
    %2198 = vmatprep.subr.bf16.mxu0 0
    %2199 = vmatpush1.bf16.msra.mxu0 0
    %2200 = vmatprep.subr.bf16.mxu0 0
    %2201 = vmatpush1.bf16.msra.mxu0 0
    %2202 = vmatprep.subr.bf16.mxu0 0
    %2203 = vmatpush1.bf16.msra.mxu0 0
    %2204 = vmatprep.subr.bf16.mxu0 0
    %2205 = vmatpush1.bf16.msra.mxu0 0
    %2206 = vmatprep.subr.bf16.mxu0 0
    %2207 = vmatpush1.bf16.msra.mxu0 0
    %2208 = vmatprep.subr.bf16.mxu0 0
    %2209 = vmatpush1.bf16.msra.mxu0 0
    %2210 = vmatprep.subr.bf16.mxu0 0
    %2211 = vmatpush1.bf16.msra.mxu0 0
    %2212 = vmatprep.subr.bf16.mxu0 0
    %2213 = vmatpush1.bf16.msra.mxu0 0
    %2214 = vmatprep.subr.bf16.mxu0 0
    %2215 = vmatpush1.bf16.msra.mxu0 0
    %2216 = vmatprep.subr.bf16.mxu0 0
    %2217 = vmatpush1.bf16.msra.mxu0 0
    %2218 = vmatprep.subr.bf16.mxu0 0
    %2219 = vmatpush1.bf16.msra.mxu0 0
    %2220 = vmatprep.subr.bf16.mxu0 0
    %2221 = vmatpush1.bf16.msra.mxu0 0
    %2222 = vmatprep.subr.bf16.mxu0 0
    %2223 = vmatpush1.bf16.msra.mxu0 0
    %2224 = vmatprep.mubr.bf16.mxu0 0
    %2225 = vmatmul.mubr.bf16.gmra.mrb[0].mxu0 %v2190
    %v2226 = vpop.f32.mrb[0].mxu0
    %v2227 = vadd.f32 %v2176, %v2226
    %v2228 = vpop.f32.mrb[0].mxu0
    %v2229 = vpop.f32.mrb[0].mxu0
    %v2230 = vpop.f32.mrb[0].mxu0
    %2231 = vdwg.mxu0
    %2232 = vst [vmem:[#allocation8] sm:$0xff] %v2227
    %2234 = vrot.lane.b32.xlu0 %v1675, 32
    %v2235 = vpop.permute.xlu0 %2234
    %2238 = vrot.lane.b32.xlu0 %v1793, 64
    %v2239 = vpop.permute.xlu0 %2238
    %2242 = vrot.lane.b32.xlu0 %v1669, 32
    %v2243 = vpop.permute.xlu0 %2242
    %2246 = vrot.lane.b32.xlu0 %v1787, 64
    %v2247 = vpop.permute.xlu0 %2246
    %v2249 = vsel %vm222, %v2235, %v2239
    %vm2250 = vcmask 523264
    %v2251 = vsel %vm2250, %v2249, %v2243
    %vm2252 = vcmask 785408
    %v2253 = vsel %vm2252, %v2251, %v2247
    %2254 = vst [vmem:[#allocation8 + $0x8] sm:$0xff] %v2253
    // Predicated region
    $region34: #{tpu_custom_call.1} parent=1 // pred_check
      _
    $region35: #{tpu_custom_call.1} parent=1 // pred_check_branch
      %2256 = sbr.rel (0) target = $region37
    $region36: #{tpu_custom_call.1} parent=1 // pred_region
      %s2258 = ssub.s32 256, 256
      %2259 = vsyncadd [#allocation4], %s2258
      %s2260 = sshll.u32 [#allocation8], 4
      %s2261 = int_to_ptr.vmem [resolvable:$true] %s2260
      %2266 = dma.vmem_to_hbm [thread:$0]  %s2261, 256, %s5, [#allocation4], 128, 128, 8
    $region37: #{tpu_custom_call.1} parent=1 // pred_fallthru
      _
    // Predicated region
    $region38: #{tpu_custom_call.1} parent=1 // pred_check
      _
    $region39: #{tpu_custom_call.1} parent=1 // pred_check_branch
      %2268 = sbr.rel (0) target = $region41
    $region40: #{tpu_custom_call.1} parent=1 // pred_region
      %2269 = dma.done [#allocation4], 256
    $region41: #{tpu_custom_call.1} parent=1 // pred_fallthru
      _
    %2270 = vsyncpa [#allocation3], 1
    %2271 = vsyncpa [#allocation6], 1
    %2272 = vsyncpa [#allocation4], 1

</llo_original>
